<compile_context>
chip_gen: v7x
topology: tpu7x:2x2x1
jax: 0.10.0
libtpu: 0.0.40
codegen_flags: <defaults>
</compile_context>

<pallas_src>
import jax
import jax.numpy as jnp
from jax import lax
from jax.experimental import pallas as pl
from jax.experimental.pallas import tpu as pltpu


_TRANS_RHS = (((1,), (1,)), ((), ()))   # contract last dim of both operands


def _vmem_limit_bytes():
    """Per-generation VMEM budget: physical minus headroom, capped at 112 MiB."""
    phys = 64 * 1024 * 1024                      # conservative fallback (v7x)
    try:
        phys = int(pltpu.get_tpu_info().vmem_capacity_bytes)
    except Exception:
        pass
    return int(max(48 * 1024 * 1024,
                   min(phys - 12 * 1024 * 1024, 112 * 1024 * 1024)))


def _cparams(dim_semantics, vmem_limit):
    return pltpu.CompilerParams(dimension_semantics=dim_semantics,
                                vmem_limit_bytes=vmem_limit)


def _softmax_last_f32(v):
    """Numerically-stable softmax over the last axis; f32 math, EUP reciprocal."""
    m = jnp.max(v, axis=-1, keepdims=True)
    e = jnp.exp(v - m)
    return e * pl.reciprocal(jnp.sum(e, axis=-1, keepdims=True), approx=True)


# ---------------------------------------------------------------------------
# 1) Fused projections.  Weights are VMEM-resident across the inner loops
#    (grid = (col tiles, B, row tiles); weight index depends only on the
#    outer axis).  xA is written pre-transposed as (B, D, T).
# ---------------------------------------------------------------------------
def _proj3_kernel(x_ref, w1_ref, w2_ref, w3_ref, xat_ref, xb_ref, xc_ref):
    x = x_ref[0]                                   # (tile_t, D)  bf16
    # xA^T tile (tile_n, tile_t): computed directly in transposed layout so
    # the scores kernel needs no transposed contraction.
    xat_ref[0] = lax.dot_general(w1_ref[...], x, _TRANS_RHS,
                                 preferred_element_type=jnp.float32
                                 ).astype(xat_ref.dtype)
    xb_ref[0] = lax.dot_general(x, w2_ref[...], _TRANS_RHS,
                                preferred_element_type=jnp.float32
                                ).astype(xb_ref.dtype)
    xc_ref[0] = lax.dot_general(x, w3_ref[...], _TRANS_RHS,
                                preferred_element_type=jnp.float32
                                ).astype(xc_ref.dtype)


# ---------------------------------------------------------------------------
# 2) S = softmax(xA^T @ xB, axis=-1), accumulated over T tiles (axis last).
# ---------------------------------------------------------------------------
def _scores_kernel(xat_ref, xb_ref, s_ref, acc_ref):
    k = pl.program_id(2)

    @pl.when(k == 0)
    def _():
        acc_ref[...] = jnp.zeros_like(acc_ref)

    acc_ref[...] += jnp.dot(xat_ref[0], xb_ref[0],
                            preferred_element_type=jnp.float32)

    @pl.when(k == pl.num_programs(2) - 1)
    def _():
        # NOTE: S is stored bf16 in HBM to halve its traffic; the matmul
        # accumulators stay f32.  Flip the out_shape dtype to f32 if the
        # downstream tolerance at D=4096 requires it.
        s_ref[0] = _softmax_last_f32(acc_ref[...]).astype(s_ref.dtype)


# ---------------------------------------------------------------------------
# 3) xO = softmax(xC @ S, axis=-1), accumulated over D (row) tiles of S.
# ---------------------------------------------------------------------------
def _apply_scores_kernel(xc_ref, s_ref, xo_ref, acc_ref):
    k = pl.program_id(2)

    @pl.when(k == 0)
    def _():
        acc_ref[...] = jnp.zeros_like(acc_ref)

    acc_ref[...] += jnp.dot(xc_ref[0], s_ref[0],
                            preferred_element_type=jnp.float32)

    @pl.when(k == pl.num_programs(2) - 1)
    def _():
        xo_ref[0] = _softmax_last_f32(acc_ref[...]).astype(xo_ref.dtype)


# ---------------------------------------------------------------------------
# 4+5 fused) y = (x + silu(xO @ W4^T)) @ Wout^T, accumulated over chunks of
#    the intermediate feature dim.  z never touches HBM.
# ---------------------------------------------------------------------------
def _ffn_out_kernel(xo_ref, w4_ref, x_ref, wout_ref, y_ref, acc_ref):
    k = pl.program_id(2)

    @pl.when(k == 0)
    def _():
        acc_ref[...] = jnp.zeros_like(acc_ref)

    # Chunk k of z = x + silu(xO @ W4^T):  h -> (tile_t, tile_k), f32.
    h = lax.dot_general(xo_ref[0], w4_ref[...], _TRANS_RHS,
                        preferred_element_type=jnp.float32)
    z = x_ref[0].astype(jnp.float32) + h * jax.nn.sigmoid(h)   # SiLU (EUP)

    # This chunk's contribution to y = z @ Wout^T.
    acc_ref[...] += lax.dot_general(z.astype(jnp.bfloat16), wout_ref[...],
                                    _TRANS_RHS,
                                    preferred_element_type=jnp.float32)

    @pl.when(k == pl.num_programs(2) - 1)
    def _():
        y_ref[0] = acc_ref[...].astype(y_ref.dtype)


def bad_transformer_block(x, w1, w2, w3, w4, wout, *,
                          tile_t=256, tile_n=512, tile_dr=512,
                          tile_ta=512, tile_k=512):
    """Forward pass of myBadTransfomerBlock.

    x  : (B, T, D) float32
    w* : (D, D) float32, PyTorch layout (out_features, in_features) — kept
         as-is; every kernel contracts the weight's last dim (no transpose).

    tile_t  : row tile for the projection and fused FFN/output kernels.
    tile_n  : weight output-column tile for the projection kernel.
    tile_dr : S row tile (scores kernel).   v5e/v6e: can raise to 1024.
    tile_ta : row tile for the apply-scores kernel.  v5e/v6e: up to 1024.
    tile_k  : contraction tile for apply-scores and fused FFN kernels.
    """
    B, T, D = x.shape
    tile_t, tile_ta = min(tile_t, T), min(tile_ta, T)
    tile_n, tile_dr, tile_k = min(tile_n, D), min(tile_dr, D), min(tile_k, D)
    assert T % tile_t == 0 and T % tile_ta == 0, "T must divide the row tiles"
    assert D % tile_n == 0 and D % tile_dr == 0 and D % tile_k == 0, \
        "D must divide the column tiles"

    bf16 = jnp.bfloat16
    # One-time bf16 cast only — NO transpose.  In a deployed model pre-pack
    # the bf16 weights once at init and skip this entirely.
    w1b, w2b, w3b, w4b, woutb = (w.astype(bf16) for w in (w1, w2, w3, w4, wout))
    x_bf = x.astype(bf16)

    vmem = _vmem_limit_bytes()
    n_t, n_ta = T // tile_t, T // tile_ta
    n_n, n_dr, n_k = D // tile_n, D // tile_dr, D // tile_k

    # ---- 1) projections (weight-resident grid order) -----------------------
    w_spec = pl.BlockSpec((tile_n, D), lambda j, b, i: (j, 0))
    xA_T, xB, xC = pl.pallas_call(
        _proj3_kernel,
        out_shape=(jax.ShapeDtypeStruct((B, D, T), bf16),    # xA^T
                   jax.ShapeDtypeStruct((B, T, D), bf16),    # xB
                   jax.ShapeDtypeStruct((B, T, D), bf16)),   # xC
        grid_spec=pltpu.PrefetchScalarGridSpec(
            num_scalar_prefetch=0,
            grid=(n_n, B, n_t),                  # weight-column axis OUTERMOST
            in_specs=[
                pl.BlockSpec((1, tile_t, D), lambda j, b, i: (b, i, 0)),
                w_spec, w_spec, w_spec,
            ],
            out_specs=(
                pl.BlockSpec((1, tile_n, tile_t), lambda j, b, i: (b, j, i)),
                pl.BlockSpec((1, tile_t, tile_n), lambda j, b, i: (b, i, j)),
                pl.BlockSpec((1, tile_t, tile_n), lambda j, b, i: (b, i, j)),
            )),
        compiler_params=_cparams(("parallel", "parallel", "parallel"), vmem),
    )(x_bf, w1b, w2b, w3b)

    # ---- 2) S = softmax(xA^T @ xB) ------------------------------------------
    S = pl.pallas_call(
        _scores_kernel,
        out_shape=jax.ShapeDtypeStruct((B, D, D), bf16),
        grid_spec=pltpu.PrefetchScalarGridSpec(
            num_scalar_prefetch=0,
            grid=(B, n_dr, n_t),                        # T reduction axis last
            in_specs=[
                pl.BlockSpec((1, tile_dr, tile_t), lambda b, i, k: (b, i, k)),
                pl.BlockSpec((1, tile_t, D), lambda b, i, k: (b, k, 0)),
            ],
            out_specs=pl.BlockSpec((1, tile_dr, D), lambda b, i, k: (b, i, 0)),
            scratch_shapes=[pltpu.VMEM((tile_dr, D), jnp.float32)]),
        compiler_params=_cparams(("parallel", "parallel", "arbitrary"), vmem),
    )(xA_T, xB)

    # ---- 3) xO = softmax(xC @ S) --------------------------------------------
    xO = pl.pallas_call(
        _apply_scores_kernel,
        out_shape=jax.ShapeDtypeStruct((B, T, D), bf16),
        grid_spec=pltpu.PrefetchScalarGridSpec(
            num_scalar_prefetch=0,
            grid=(B, n_ta, n_k),                        # D reduction axis last
            in_specs=[
                pl.BlockSpec((1, tile_ta, tile_k), lambda b, i, k: (b, i, k)),
                pl.BlockSpec((1, tile_k, D), lambda b, i, k: (b, k, 0)),
            ],
            out_specs=pl.BlockSpec((1, tile_ta, D), lambda b, i, k: (b, i, 0)),
            scratch_shapes=[pltpu.VMEM((tile_ta, D), jnp.float32)]),
        compiler_params=_cparams(("parallel", "parallel", "arbitrary"), vmem),
    )(xC, S)

    # ---- 4+5 fused) y = (x + silu(xO @ W4^T)) @ Wout^T ------------------------
    y = pl.pallas_call(
        _ffn_out_kernel,
        out_shape=jax.ShapeDtypeStruct((B, T, D), x.dtype),
        grid_spec=pltpu.PrefetchScalarGridSpec(
            num_scalar_prefetch=0,
            grid=(B, n_t, n_k),              # intermediate-feature reduction last
            in_specs=[
                pl.BlockSpec((1, tile_t, D), lambda b, i, k: (b, i, 0)),       # xO row (resident)
                pl.BlockSpec((tile_k, D), lambda b, i, k: (k, 0)),             # W4 row slab
                pl.BlockSpec((1, tile_t, tile_k), lambda b, i, k: (b, i, k)),  # x residual chunk (bf16)
                pl.BlockSpec((D, tile_k), lambda b, i, k: (0, k)),             # Wout column slab
            ],
            out_specs=pl.BlockSpec((1, tile_t, D), lambda b, i, k: (b, i, 0)),
            scratch_shapes=[pltpu.VMEM((tile_t, D), jnp.float32)]),
        compiler_params=_cparams(("parallel", "parallel", "arbitrary"), vmem),
    )(xO, w4b, x_bf, woutb)

    return y


def _reference(x, w1, w2, w3, w4, wout):
    # Pure-JAX f32 reference mirroring the PyTorch forward exactly.
    xA = x @ w1.T
    xB = x @ w2.T
    xC = x @ w3.T
    s = jnp.einsum('btd,bte->bde', xA, xB)          # xA.transpose(1,2) @ xB
    s = jax.nn.softmax(s, axis=-1)
    xo = jnp.einsum('btd,bde->bte', xC, s)
    xo = jax.nn.softmax(xo, axis=-1)
    xo = xo @ w4.T
    xo = xo * jax.nn.sigmoid(xo)
    return (x + xo) @ wout.T


if __name__ == "__main__":
    # Small shapes consistent with the module (the real module uses D=4096;
    # dataflow and tiling are identical, just scaled down).  Tiles are chosen
    # so every grid axis — row tiles, column tiles, and both reduction axes —
    # has >= 2 steps and the accumulator init/finalize paths are exercised.
    B, T, D = 2, 512, 256

    key = jax.random.PRNGKey(0)
    kx, k1, k2, k3, k4, k5 = jax.random.split(key, 6)
    scale = 1.0 / (D ** 0.5)
    x = jax.random.normal(kx, (B, T, D), dtype=jnp.float32)
    w1 = jax.random.normal(k1, (D, D), dtype=jnp.float32) * scale
    w2 = jax.random.normal(k2, (D, D), dtype=jnp.float32) * scale
    w3 = jax.random.normal(k3, (D, D), dtype=jnp.float32) * scale
    w4 = jax.random.normal(k4, (D, D), dtype=jnp.float32) * scale
    wout = jax.random.normal(k5, (D, D), dtype=jnp.float32) * scale

    out = bad_transformer_block(x, w1, w2, w3, w4, wout,
                                tile_t=256, tile_n=128, tile_dr=128,
                                tile_ta=256, tile_k=128)
    out = jax.block_until_ready(out)

    ref = _reference(x, w1, w2, w3, w4, wout)
    assert out.shape == ref.shape and out.dtype == ref.dtype
    # bf16 MXU inputs with f32 accumulation -> ~1e-2-level deviation expected.
    assert jnp.allclose(out, ref, atol=5e-2, rtol=5e-2), (
        "mismatch vs reference: max |diff| = "
        f"{jnp.max(jnp.abs(out - ref))}")

    print("KERNEL_OK")
</pallas_src>

<mosaic_0001>
module attributes {stable_mosaic.version = 11 : i64} {
  func.func @_proj3_kernel(%arg0: i32, %arg1: i32, %arg2: i32, %arg3: memref<1x256x256xbf16, #tpu.memory_space<vmem>>, %arg4: memref<128x256xbf16, #tpu.memory_space<vmem>>, %arg5: memref<128x256xbf16, #tpu.memory_space<vmem>>, %arg6: memref<128x256xbf16, #tpu.memory_space<vmem>>, %arg7: memref<1x128x256xbf16, #tpu.memory_space<vmem>>, %arg8: memref<1x256x128xbf16, #tpu.memory_space<vmem>>, %arg9: memref<1x256x128xbf16, #tpu.memory_space<vmem>>) attributes {dimension_semantics = [#tpu.dimension_semantics<parallel>, #tpu.dimension_semantics<parallel>, #tpu.dimension_semantics<parallel>], iteration_bounds = array<i64: 2, 2, 2>, scalar_prefetch = 0 : i64, scratch_operands = 0 : i64, tpu.core_type = #tpu.core_type<tc>, window_params = [{transform_indices = @transform_0, window_bounds = array<i64: 1, 256, 256>}, {transform_indices = @transform_1, window_bounds = array<i64: 128, 256>}, {transform_indices = @transform_2, window_bounds = array<i64: 128, 256>}, {transform_indices = @transform_3, window_bounds = array<i64: 128, 256>}, {transform_indices = @transform_4, window_bounds = array<i64: 1, 128, 256>}, {transform_indices = @transform_5, window_bounds = array<i64: 1, 256, 128>}, {transform_indices = @transform_6, window_bounds = array<i64: 1, 256, 128>}]} {
    %c0 = arith.constant 0 : index
    %c0_0 = arith.constant 0 : index
    %c0_1 = arith.constant 0 : index
    %0 = vector.load %arg3[%c0, %c0_0, %c0_1] : memref<1x256x256xbf16, #tpu.memory_space<vmem>>, vector<1x256x256xbf16>
    %1 = vector.shape_cast %0 : vector<1x256x256xbf16> to vector<256x256xbf16>
    %c0_2 = arith.constant 0 : index
    %c0_3 = arith.constant 0 : index
    %2 = vector.load %arg4[%c0_2, %c0_3] : memref<128x256xbf16, #tpu.memory_space<vmem>>, vector<128x256xbf16>
    %cst = arith.constant dense<0.000000e+00> : vector<128x256xf32>
    %3 = tpu.matmul %2, %1, %cst {dimension_numbers = #tpu.dot_dimension_numbers<[1], [1], [0], [0], [0, 0, 1, 0], [], []>} : vector<128x256xbf16>, vector<256x256xbf16>, vector<128x256xf32> -> vector<128x256xf32>
    %4 = arith.truncf %3 : vector<128x256xf32> to vector<128x256xbf16>
    %c0_4 = arith.constant 0 : index
    %c0_5 = arith.constant 0 : index
    %c0_6 = arith.constant 0 : index
    %5 = vector.load %arg7[%c0_4, %c0_5, %c0_6] : memref<1x128x256xbf16, #tpu.memory_space<vmem>>, vector<1x128x256xbf16>
    %6 = vector.shape_cast %5 : vector<1x128x256xbf16> to vector<128x256xbf16>
    %7 = vector.shape_cast %4 : vector<128x256xbf16> to vector<1x128x256xbf16>
    tpu.vector_store %arg7[%c0_4, %c0_5, %c0_6], %7 {strides = array<i32>} : memref<1x128x256xbf16, #tpu.memory_space<vmem>>, vector<1x128x256xbf16>,
    %c0_7 = arith.constant 0 : index
    %c0_8 = arith.constant 0 : index
    %8 = vector.load %arg5[%c0_7, %c0_8] : memref<128x256xbf16, #tpu.memory_space<vmem>>, vector<128x256xbf16>
    %cst_9 = arith.constant dense<0.000000e+00> : vector<256x128xf32>
    %9 = tpu.matmul %1, %8, %cst_9 {dimension_numbers = #tpu.dot_dimension_numbers<[1], [1], [0], [0], [0, 0, 1, 0], [], []>} : vector<256x256xbf16>, vector<128x256xbf16>, vector<256x128xf32> -> vector<256x128xf32>
    %10 = arith.truncf %9 : vector<256x128xf32> to vector<256x128xbf16>
    %c0_10 = arith.constant 0 : index
    %c0_11 = arith.constant 0 : index
    %c0_12 = arith.constant 0 : index
    %11 = vector.load %arg8[%c0_10, %c0_11, %c0_12] : memref<1x256x128xbf16, #tpu.memory_space<vmem>>, vector<1x256x128xbf16>
    %12 = vector.shape_cast %11 : vector<1x256x128xbf16> to vector<256x128xbf16>
    %13 = vector.shape_cast %10 : vector<256x128xbf16> to vector<1x256x128xbf16>
    tpu.vector_store %arg8[%c0_10, %c0_11, %c0_12], %13 {strides = array<i32>} : memref<1x256x128xbf16, #tpu.memory_space<vmem>>, vector<1x256x128xbf16>,
    %c0_13 = arith.constant 0 : index
    %c0_14 = arith.constant 0 : index
    %14 = vector.load %arg6[%c0_13, %c0_14] : memref<128x256xbf16, #tpu.memory_space<vmem>>, vector<128x256xbf16>
    %cst_15 = arith.constant dense<0.000000e+00> : vector<256x128xf32>
    %15 = tpu.matmul %1, %14, %cst_15 {dimension_numbers = #tpu.dot_dimension_numbers<[1], [1], [0], [0], [0, 0, 1, 0], [], []>} : vector<256x256xbf16>, vector<128x256xbf16>, vector<256x128xf32> -> vector<256x128xf32>
    %16 = arith.truncf %15 : vector<256x128xf32> to vector<256x128xbf16>
    %c0_16 = arith.constant 0 : index
    %c0_17 = arith.constant 0 : index
    %c0_18 = arith.constant 0 : index
    %17 = vector.load %arg9[%c0_16, %c0_17, %c0_18] : memref<1x256x128xbf16, #tpu.memory_space<vmem>>, vector<1x256x128xbf16>
    %18 = vector.shape_cast %17 : vector<1x256x128xbf16> to vector<256x128xbf16>
    %19 = vector.shape_cast %16 : vector<256x128xbf16> to vector<1x256x128xbf16>
    tpu.vector_store %arg9[%c0_16, %c0_17, %c0_18], %19 {strides = array<i32>} : memref<1x256x128xbf16, #tpu.memory_space<vmem>>, vector<1x256x128xbf16>,
    return
  }
  func.func @transform_0(%arg0: i32, %arg1: i32, %arg2: i32) -> (i32, i32, i32) {
    %c0_i32 = arith.constant 0 : i32
    %c0_i32_0 = arith.constant 0 : i32
    return %arg1, %arg2, %c0_i32 : i32, i32, i32
  }
  func.func @transform_1(%arg0: i32, %arg1: i32, %arg2: i32) -> (i32, i32) {
    %c0_i32 = arith.constant 0 : i32
    %c0_i32_0 = arith.constant 0 : i32
    return %arg0, %c0_i32 : i32, i32
  }
  func.func @transform_2(%arg0: i32, %arg1: i32, %arg2: i32) -> (i32, i32) {
    %c0_i32 = arith.constant 0 : i32
    %c0_i32_0 = arith.constant 0 : i32
    return %arg0, %c0_i32 : i32, i32
  }
  func.func @transform_3(%arg0: i32, %arg1: i32, %arg2: i32) -> (i32, i32) {
    %c0_i32 = arith.constant 0 : i32
    %c0_i32_0 = arith.constant 0 : i32
    return %arg0, %c0_i32 : i32, i32
  }
  func.func @transform_4(%arg0: i32, %arg1: i32, %arg2: i32) -> (i32, i32, i32) {
    %c0_i32 = arith.constant 0 : i32
    return %arg1, %arg0, %arg2 : i32, i32, i32
  }
  func.func @transform_5(%arg0: i32, %arg1: i32, %arg2: i32) -> (i32, i32, i32) {
    %c0_i32 = arith.constant 0 : i32
    return %arg1, %arg2, %arg0 : i32, i32, i32
  }
  func.func @transform_6(%arg0: i32, %arg1: i32, %arg2: i32) -> (i32, i32, i32) {
    %c0_i32 = arith.constant 0 : i32
    return %arg1, %arg2, %arg0 : i32, i32, i32
  }
}

</mosaic_0001>

<llo_original>
// kernel: tpu_custom_call.1
$region0: #{tpu_custom_call.1}
  #allocation0 [shape = 'u32[]', space=smem, size = 0x4, offset = 0x4, fixed_abs, tag = 'smem constant byte address 0x4 - core index']
  #allocation1 [shape = 'u32[144,128]{1,0:T(1,128)}', space=vmem, size = 0x12000, scoped, tag = 'internal scratch']
  %s0 = inlined_call_operand.hbm [shape: bf16[2,512,256], index: 0, kind: input, shape index: {}]
  %s1 = inlined_call_operand.hbm [shape: bf16[256,256], index: 1, kind: input, shape index: {}]
  %s2 = inlined_call_operand.hbm [shape: bf16[256,256], index: 2, kind: input, shape index: {}]
  %s3 = inlined_call_operand.hbm [shape: bf16[256,256], index: 3, kind: input, shape index: {}]
  %s4 = inlined_call_operand.hbm [shape: bf16[2,256,512], index: 4, kind: output, shape index: {0}]
  %s5 = inlined_call_operand.hbm [shape: bf16[2,512,256], index: 5, kind: output, shape index: {1}]
  %s6 = inlined_call_operand.hbm [shape: bf16[2,512,256], index: 6, kind: output, shape index: {2}]
  %7 = xla_tuple %s4, %s5, %s6
  %s8 = sld [smem:[#allocation0]]
  $region81: #{tpu_custom_call.1} parent=0
    _
  %s10 = ssub.s32 1, %s8
  %s11 = scalar_select 0, %s10, %s8
  $region1: #{tpu_custom_call.1} parent=0
    #allocation2 [shape = 'u8[262144]{0}', space=vmem, size = 0x40000, scoped, tag = 'input window, operand 0']
    #allocation3 [shape = 's32[2]{0}', space=sflag, size = 0x8, scoped, tag = 'scoped memory for tpu_custom_call.1']
    #allocation4 [shape = 's32[2]{0}', space=sflag, size = 0x8, scoped, tag = 'scoped memory for tpu_custom_call.1']
    #allocation5 [shape = 'u8[131072]{0}', space=vmem, size = 0x20000, scoped, tag = 'input window, operand 1']
    #allocation6 [shape = 's32[2]{0}', space=sflag, size = 0x8, scoped, tag = 'scoped memory for tpu_custom_call.1']
    #allocation7 [shape = 'u8[131072]{0}', space=vmem, size = 0x20000, scoped, tag = 'input window, operand 2']
    #allocation8 [shape = 'u8[131072]{0}', space=vmem, size = 0x20000, scoped, tag = 'input window, operand 3']
    #allocation9 [shape = 's32[2]{0}', space=sflag, size = 0x8, scoped, tag = 'scoped memory for tpu_custom_call.1']
    #allocation10 [shape = 'u8[131072]{0}', space=vmem, size = 0x20000, scoped, tag = 'output window, operand 0']
    #allocation11 [shape = 'u8[131072]{0}', space=vmem, size = 0x20000, scoped, tag = 'output window, operand 1']
    #allocation12 [shape = 's32[2]{0}', space=sflag, size = 0x8, scoped, tag = 'scoped memory for tpu_custom_call.1']
    #allocation13 [shape = 'u8[131072]{0}', space=vmem, size = 0x20000, scoped, tag = 'output window, operand 2']
    %12 = vsyncpa [#allocation3], 0
    %s13 = scalar_lea.sflag [#allocation3], 1
    %14 = vsyncpa %s13, 0
    %15 = vsyncpa [#allocation6], 0
    %s16 = scalar_lea.sflag [#allocation6], 1
    %17 = vsyncpa %s16, 0
    %18 = vsyncpa [#allocation9], 0
    %s19 = scalar_lea.sflag [#allocation9], 1
    %20 = vsyncpa %s19, 0
    %21 = vsyncpa [#allocation4], 0
    %s22 = scalar_lea.sflag [#allocation4], 1
    %23 = vsyncpa %s22, 0
    %24 = vsyncpa [#allocation12], 0
    %s25 = scalar_lea.sflag [#allocation12], 1
    %26 = vsyncpa %s25, 0
    loop: start=0, step=1, limit=10
    $region2: #{tpu_custom_call.1} parent=1 // loop_pre_header
      _
    $region3: #{tpu_custom_call.1} parent=1 // loop_header
      %s28 = sphi 0, %s32
      %p29 = scmp.ge.s32.totalorder %s28, 10
      %s35 = sphi 0, %s54
      %s36 = sphi 0, %s50
      %s37 = sphi 0, %s46
      %s38 = sphi 0, %s35
      %s39 = sphi 0, %s36
      %s40 = sphi 0, %s37
      %s41 = sphi 0, %s38
      %s42 = sphi 0, %s39
      %s43 = sphi 0, %s40
      %s59 = sphi 0, %s61
      %s62 = sphi 0, %s59
      %s63 = sphi 0, %s62
      %s79 = sphi 0, %s63
      %s85 = sphi 0, %s87
      %s88 = sphi 0, %s85
      %s89 = sphi 0, %s88
      %s105 = sphi 0, %s89
      %s111 = sphi 0, %s113
      %s114 = sphi 0, %s111
      %s115 = sphi 0, %s114
      %s131 = sphi 0, %s115
      %s137 = sphi 0, %s139
      %s140 = sphi 0, %s137
      %s141 = sphi 0, %s140
      %s157 = sphi 0, %s141
      %s167 = sphi 0, %s169
      %s170 = sphi 0, %s167
      %s171 = sphi 0, %s170
      %s187 = sphi 0, %s171
      %s197 = sphi 0, %s199
      %s200 = sphi 0, %s197
      %s201 = sphi 0, %s200
      %s217 = sphi 0, %s201
      %s227 = sphi 0, %s229
      %s230 = sphi 0, %s227
      %s231 = sphi 0, %s230
      %s247 = sphi 0, %s231
    $region4: #{tpu_custom_call.1} parent=1 // loop_header_branch
      %31 = sbr.rel (%p29) target = $region8
    $region5: #{tpu_custom_call.1} parent=1 // loop_body
      %s33 = ssub.s32 %s28, 1
      %s34 = ssub.s32 %s28, 2
      %s44 = sadd.s32 1, %s37
      %p45 = scmp.ge.s32.totalorder %s44, 2
      %s46 = scalar_select %p45, 0, %s44
      %s47 = sadd.s32 1, %s36
      %s48 = scalar_select %p45, %s47, %s36
      %p49 = scmp.ge.s32.totalorder %s48, 2
      %s50 = scalar_select %p49, 0, %s48
      %s51 = sadd.s32 1, %s35
      %s52 = scalar_select %p49, %s51, %s35
      %p53 = scmp.ge.s32.totalorder %s52, 2
      %s54 = scalar_select %p53, 0, %s52
      %s55 = ssub.s32 %s36, %s50
      %s56 = ssub.s32 %s37, %s46
      %s57 = sor.u32 %s55, %s56
      %p58 = scmp.eq.s32.totalorder %s57, 0
      %s60 = sadd.s32 %s59, 1
      %s61 = scalar_select %p58, %s59, %s60
      %p64 = pneg %p58
      %p65 = scmp.eq.s32.totalorder %s28, 7
      %p66 = por %p64, %p65
      %p67 = scmp.ne.s32.totalorder %s59, %s62
      %p68 = scmp.eq.s32.totalorder %s28, 0
      %p69 = por %p67, %p68
      %p70 = scmp.ne.s32.totalorder %s59, %s62
      %p71 = scmp.eq.s32.totalorder %s33, 7
      %p72 = por %p70, %p71
      %p73 = scmp.ne.s32.totalorder %s62, %s63
      %p74 = scmp.eq.s32.totalorder %s33, 0
      %p75 = por %p73, %p74
      %p76 = scmp.ne.s32.totalorder %s62, %s63
      %p77 = scmp.eq.s32.totalorder %s34, 7
      %p78 = por %p76, %p77
      %p80 = scmp.ne.s32.totalorder %s63, %s79
      %p81 = scmp.eq.s32.totalorder %s34, 0
      %p82 = por %p80, %p81
      %s83 = ssub.s32 %s35, %s54
      %p84 = scmp.eq.s32.totalorder %s83, 0
      %s86 = sadd.s32 %s85, 1
      %s87 = scalar_select %p84, %s85, %s86
      %p90 = pneg %p84
      %p91 = scmp.eq.s32.totalorder %s28, 7
      %p92 = por %p90, %p91
      %p93 = scmp.ne.s32.totalorder %s85, %s88
      %p94 = scmp.eq.s32.totalorder %s28, 0
      %p95 = por %p93, %p94
      %p96 = scmp.ne.s32.totalorder %s85, %s88
      %p97 = scmp.eq.s32.totalorder %s33, 7
      %p98 = por %p96, %p97
      %p99 = scmp.ne.s32.totalorder %s88, %s89
      %p100 = scmp.eq.s32.totalorder %s33, 0
      %p101 = por %p99, %p100
      %p102 = scmp.ne.s32.totalorder %s88, %s89
      %p103 = scmp.eq.s32.totalorder %s34, 7
      %p104 = por %p102, %p103
      %p106 = scmp.ne.s32.totalorder %s89, %s105
      %p107 = scmp.eq.s32.totalorder %s34, 0
      %p108 = por %p106, %p107
      %s109 = ssub.s32 %s35, %s54
      %p110 = scmp.eq.s32.totalorder %s109, 0
      %s112 = sadd.s32 %s111, 1
      %s113 = scalar_select %p110, %s111, %s112
      %p116 = pneg %p110
      %p117 = scmp.eq.s32.totalorder %s28, 7
      %p118 = por %p116, %p117
      %p119 = scmp.ne.s32.totalorder %s111, %s114
      %p120 = scmp.eq.s32.totalorder %s28, 0
      %p121 = por %p119, %p120
      %p122 = scmp.ne.s32.totalorder %s111, %s114
      %p123 = scmp.eq.s32.totalorder %s33, 7
      %p124 = por %p122, %p123
      %p125 = scmp.ne.s32.totalorder %s114, %s115
      %p126 = scmp.eq.s32.totalorder %s33, 0
      %p127 = por %p125, %p126
      %p128 = scmp.ne.s32.totalorder %s114, %s115
      %p129 = scmp.eq.s32.totalorder %s34, 7
      %p130 = por %p128, %p129
      %p132 = scmp.ne.s32.totalorder %s115, %s131
      %p133 = scmp.eq.s32.totalorder %s34, 0
      %p134 = por %p132, %p133
      %s135 = ssub.s32 %s35, %s54
      %p136 = scmp.eq.s32.totalorder %s135, 0
      %s138 = sadd.s32 %s137, 1
      %s139 = scalar_select %p136, %s137, %s138
      %p142 = pneg %p136
      %p143 = scmp.eq.s32.totalorder %s28, 7
      %p144 = por %p142, %p143
      %p145 = scmp.ne.s32.totalorder %s137, %s140
      %p146 = scmp.eq.s32.totalorder %s28, 0
      %p147 = por %p145, %p146
      %p148 = scmp.ne.s32.totalorder %s137, %s140
      %p149 = scmp.eq.s32.totalorder %s33, 7
      %p150 = por %p148, %p149
      %p151 = scmp.ne.s32.totalorder %s140, %s141
      %p152 = scmp.eq.s32.totalorder %s33, 0
      %p153 = por %p151, %p152
      %p154 = scmp.ne.s32.totalorder %s140, %s141
      %p155 = scmp.eq.s32.totalorder %s34, 7
      %p156 = por %p154, %p155
      %p158 = scmp.ne.s32.totalorder %s141, %s157
      %p159 = scmp.eq.s32.totalorder %s34, 0
      %p160 = por %p158, %p159
      %s161 = ssub.s32 %s36, %s50
      %s162 = ssub.s32 %s35, %s54
      %s163 = sor.u32 %s161, %s162
      %s164 = ssub.s32 %s37, %s46
      %s165 = sor.u32 %s163, %s164
      %p166 = scmp.eq.s32.totalorder %s165, 0
      %s168 = sadd.s32 %s167, 1
      %s169 = scalar_select %p166, %s167, %s168
      %p172 = pneg %p166
      %p173 = scmp.eq.s32.totalorder %s28, 7
      %p174 = por %p172, %p173
      %p175 = scmp.ne.s32.totalorder %s167, %s170
      %p176 = scmp.eq.s32.totalorder %s28, 0
      %p177 = por %p175, %p176
      %p178 = scmp.ne.s32.totalorder %s167, %s170
      %p179 = scmp.eq.s32.totalorder %s33, 7
      %p180 = por %p178, %p179
      %p181 = scmp.ne.s32.totalorder %s170, %s171
      %p182 = scmp.eq.s32.totalorder %s33, 0
      %p183 = por %p181, %p182
      %p184 = scmp.ne.s32.totalorder %s170, %s171
      %p185 = scmp.eq.s32.totalorder %s34, 7
      %p186 = por %p184, %p185
      %p188 = scmp.ne.s32.totalorder %s171, %s187
      %p189 = scmp.eq.s32.totalorder %s34, 0
      %p190 = por %p188, %p189
      %s191 = ssub.s32 %s36, %s50
      %s192 = ssub.s32 %s37, %s46
      %s193 = sor.u32 %s191, %s192
      %s194 = ssub.s32 %s35, %s54
      %s195 = sor.u32 %s193, %s194
      %p196 = scmp.eq.s32.totalorder %s195, 0
      %s198 = sadd.s32 %s197, 1
      %s199 = scalar_select %p196, %s197, %s198
      %p202 = pneg %p196
      %p203 = scmp.eq.s32.totalorder %s28, 7
      %p204 = por %p202, %p203
      %p205 = scmp.ne.s32.totalorder %s197, %s200
      %p206 = scmp.eq.s32.totalorder %s28, 0
      %p207 = por %p205, %p206
      %p208 = scmp.ne.s32.totalorder %s197, %s200
      %p209 = scmp.eq.s32.totalorder %s33, 7
      %p210 = por %p208, %p209
      %p211 = scmp.ne.s32.totalorder %s200, %s201
      %p212 = scmp.eq.s32.totalorder %s33, 0
      %p213 = por %p211, %p212
      %p214 = scmp.ne.s32.totalorder %s200, %s201
      %p215 = scmp.eq.s32.totalorder %s34, 7
      %p216 = por %p214, %p215
      %p218 = scmp.ne.s32.totalorder %s201, %s217
      %p219 = scmp.eq.s32.totalorder %s34, 0
      %p220 = por %p218, %p219
      %s221 = ssub.s32 %s36, %s50
      %s222 = ssub.s32 %s37, %s46
      %s223 = sor.u32 %s221, %s222
      %s224 = ssub.s32 %s35, %s54
      %s225 = sor.u32 %s223, %s224
      %p226 = scmp.eq.s32.totalorder %s225, 0
      %s228 = sadd.s32 %s227, 1
      %s229 = scalar_select %p226, %s227, %s228
      %p232 = pneg %p226
      %p233 = scmp.eq.s32.totalorder %s28, 7
      %p234 = por %p232, %p233
      %p235 = scmp.ne.s32.totalorder %s227, %s230
      %p236 = scmp.eq.s32.totalorder %s28, 0
      %p237 = por %p235, %p236
      %p238 = scmp.ne.s32.totalorder %s227, %s230
      %p239 = scmp.eq.s32.totalorder %s33, 7
      %p240 = por %p238, %p239
      %p241 = scmp.ne.s32.totalorder %s230, %s231
      %p242 = scmp.eq.s32.totalorder %s33, 0
      %p243 = por %p241, %p242
      %p244 = scmp.ne.s32.totalorder %s230, %s231
      %p245 = scmp.eq.s32.totalorder %s34, 7
      %p246 = por %p244, %p245
      %p248 = scmp.ne.s32.totalorder %s231, %s247
      %p249 = scmp.eq.s32.totalorder %s34, 0
      %p250 = por %p248, %p249
      %p251 = scmp.le.s32.totalorder 1, %s28
      %p252 = scmp.lt.s32.totalorder %s28, 9
      %p253 = pnand %p251, %p252
      %p254 = pneg %p253
      // Predicated region
      $region9: #{tpu_custom_call.1} parent=5 // pred_check
        _
      $region10: #{tpu_custom_call.1} parent=5 // pred_check_branch
        %256 = sbr.rel (%p253) target = $region12
      $region11: #{tpu_custom_call.1} parent=5 // pred_region
        %s257 = ssub.s32 %s28, 1
      $region12: #{tpu_custom_call.1} parent=5 // pred_fallthru
        _
      %p258 = scmp.lt.s32.totalorder %s28, 8
      // Predicated region
      $region13: #{tpu_custom_call.1} parent=5 // pred_check
        %p259 = pneg %p258
      $region14: #{tpu_custom_call.1} parent=5 // pred_check_branch
        %261 = sbr.rel (%p259) target = $region16
      $region15: #{tpu_custom_call.1} parent=5 // pred_region
        // Predicated region
        $region17: #{tpu_custom_call.1} parent=15 // pred_check
          %p262 = pneg %p69
        $region18: #{tpu_custom_call.1} parent=15 // pred_check_branch
          %264 = sbr.rel (%p262) target = $region20
        $region19: #{tpu_custom_call.1} parent=15 // pred_region
          %s265 = sand.u32 %s59, 1
          %s266 = scalar_lea.sflag [#allocation3], %s265
          %s267 = sand.u32 %s59, 1
          %s268 = smul.addr %s267, 256
          %s269 = scalar_lea.vmem [#allocation2], %s268
          %s270 = smul.u32 32, %s37
          %s272 = ssub.s32 4096, 4096
          %273 = vsyncadd %s266, %s272
          %s274 = smul.addr %s270, 2
          %s275 = smul.addr %s36, 128
          %s276 = sadd.s32 %s274, %s275
          %s277 = smul.addr %s276, 64
          %s278 = scalar_lea.hbm %s0, %s277
          %s279 = sshll.u32 %s269, 4
          %s280 = int_to_ptr.vmem [resolvable:$true] %s279
          %285 = dma.hbm_to_vmem [thread:$0]  %s278, 4096, %s280, %s266, 128, 128, 8
        $region20: #{tpu_custom_call.1} parent=15 // pred_fallthru
          _
        // Predicated region
        $region21: #{tpu_custom_call.1} parent=15 // pred_check
          %p286 = pneg %p95
        $region22: #{tpu_custom_call.1} parent=15 // pred_check_branch
          %288 = sbr.rel (%p286) target = $region24
        $region23: #{tpu_custom_call.1} parent=15 // pred_region
          %s289 = sand.u32 %s28, 1
          %s290 = scalar_lea.sflag [#allocation6], %s289
          %s291 = sand.u32 %s85, 1
          %s292 = smul.addr %s291, 128
          %s293 = scalar_lea.vmem [#allocation5], %s292
          %s294 = smul.u32 16, %s35
          %s296 = ssub.s32 2048, 2048
          %297 = vsyncadd %s290, %s296
          %s298 = smul.addr %s294, 2
          %s299 = smul.addr %s298, 64
          %s300 = scalar_lea.hbm %s1, %s299
          %s301 = sshll.u32 %s293, 4
          %s302 = int_to_ptr.vmem [resolvable:$true] %s301
          %307 = dma.hbm_to_vmem [thread:$0]  %s300, 2048, %s302, %s290, 128, 128, 8
        $region24: #{tpu_custom_call.1} parent=15 // pred_fallthru
          _
        // Predicated region
        $region25: #{tpu_custom_call.1} parent=15 // pred_check
          %p308 = pneg %p121
        $region26: #{tpu_custom_call.1} parent=15 // pred_check_branch
          %310 = sbr.rel (%p308) target = $region28
        $region27: #{tpu_custom_call.1} parent=15 // pred_region
          %s311 = sand.u32 %s28, 1
          %s312 = scalar_lea.sflag [#allocation6], %s311
          %s313 = sand.u32 %s111, 1
          %s314 = smul.addr %s313, 128
          %s315 = scalar_lea.vmem [#allocation7], %s314
          %s316 = smul.u32 16, %s35
          %s318 = ssub.s32 2048, 2048
          %319 = vsyncadd %s312, %s318
          %s320 = smul.addr %s316, 2
          %s321 = smul.addr %s320, 64
          %s322 = scalar_lea.hbm %s2, %s321
          %s323 = sshll.u32 %s315, 4
          %s324 = int_to_ptr.vmem [resolvable:$true] %s323
          %329 = dma.hbm_to_vmem [thread:$0]  %s322, 2048, %s324, %s312, 128, 128, 8
        $region28: #{tpu_custom_call.1} parent=15 // pred_fallthru
          _
        // Predicated region
        $region29: #{tpu_custom_call.1} parent=15 // pred_check
          %p330 = pneg %p147
        $region30: #{tpu_custom_call.1} parent=15 // pred_check_branch
          %332 = sbr.rel (%p330) target = $region32
        $region31: #{tpu_custom_call.1} parent=15 // pred_region
          %s333 = sand.u32 %s137, 1
          %s334 = scalar_lea.sflag [#allocation9], %s333
          %s335 = sand.u32 %s137, 1
          %s336 = smul.addr %s335, 128
          %s337 = scalar_lea.vmem [#allocation8], %s336
          %s338 = smul.u32 16, %s35
          %s340 = ssub.s32 2048, 2048
          %341 = vsyncadd %s334, %s340
          %s342 = smul.addr %s338, 2
          %s343 = smul.addr %s342, 64
          %s344 = scalar_lea.hbm %s3, %s343
          %s345 = sshll.u32 %s337, 4
          %s346 = int_to_ptr.vmem [resolvable:$true] %s345
          %351 = dma.hbm_to_vmem [thread:$0]  %s344, 2048, %s346, %s334, 128, 128, 8
        $region32: #{tpu_custom_call.1} parent=15 // pred_fallthru
          _
      $region16: #{tpu_custom_call.1} parent=5 // pred_fallthru
        _
      %p352 = scmp.le.s32.totalorder 1, %s28
      %p353 = scmp.lt.s32.totalorder %s28, 9
      %p354 = pnand %p352, %p353
      %p355 = pneg %p354
      // Predicated region
      $region33: #{tpu_custom_call.1} parent=5 // pred_check
        _
      $region34: #{tpu_custom_call.1} parent=5 // pred_check_branch
        %357 = sbr.rel (%p354) target = $region36
      $region35: #{tpu_custom_call.1} parent=5 // pred_region
        %s358 = ssub.s32 %s28, 1
        %s359 = sand.u32 %s62, 1
        %s360 = scalar_lea.sflag [#allocation3], %s359
        %s361 = sand.u32 %s62, 1
        %s362 = smul.addr %s361, 256
        %s363 = scalar_lea.vmem [#allocation2], %s362
        // Predicated region
        $region37: #{tpu_custom_call.1} parent=35 // pred_check
          %p364 = pneg %p75
        $region38: #{tpu_custom_call.1} parent=35 // pred_check_branch
          %366 = sbr.rel (%p364) target = $region40
        $region39: #{tpu_custom_call.1} parent=35 // pred_region
          %367 = dma.done %s360, 4096
        $region40: #{tpu_custom_call.1} parent=35 // pred_fallthru
          _
        %s368 = sand.u32 %s33, 1
        %s369 = scalar_lea.sflag [#allocation6], %s368
        %s370 = sand.u32 %s88, 1
        %s371 = smul.addr %s370, 128
        %s372 = scalar_lea.vmem [#allocation5], %s371
        // Predicated region
        $region41: #{tpu_custom_call.1} parent=35 // pred_check
          %p373 = pneg %p101
        $region42: #{tpu_custom_call.1} parent=35 // pred_check_branch
          %375 = sbr.rel (%p373) target = $region44
        $region43: #{tpu_custom_call.1} parent=35 // pred_region
          %376 = dma.done %s369, 2048
        $region44: #{tpu_custom_call.1} parent=35 // pred_fallthru
          _
        %s377 = sand.u32 %s33, 1
        %s378 = scalar_lea.sflag [#allocation6], %s377
        %s379 = sand.u32 %s114, 1
        %s380 = smul.addr %s379, 128
        %s381 = scalar_lea.vmem [#allocation7], %s380
        // Predicated region
        $region45: #{tpu_custom_call.1} parent=35 // pred_check
          %p382 = pneg %p127
        $region46: #{tpu_custom_call.1} parent=35 // pred_check_branch
          %384 = sbr.rel (%p382) target = $region48
        $region47: #{tpu_custom_call.1} parent=35 // pred_region
          %385 = dma.done %s378, 2048
        $region48: #{tpu_custom_call.1} parent=35 // pred_fallthru
          _
        %s386 = sand.u32 %s140, 1
        %s387 = scalar_lea.sflag [#allocation9], %s386
        %s388 = sand.u32 %s140, 1
        %s389 = smul.addr %s388, 128
        %s390 = scalar_lea.vmem [#allocation8], %s389
        // Predicated region
        $region49: #{tpu_custom_call.1} parent=35 // pred_check
          %p391 = pneg %p153
        $region50: #{tpu_custom_call.1} parent=35 // pred_check_branch
          %393 = sbr.rel (%p391) target = $region52
        $region51: #{tpu_custom_call.1} parent=35 // pred_region
          %394 = dma.done %s387, 2048
        $region52: #{tpu_custom_call.1} parent=35 // pred_fallthru
          _
        %s395 = sand.u32 %s62, 1
        %s396 = scalar_lea.sflag [#allocation3], %s395
        %s397 = sand.u32 %s62, 1
        %s398 = smul.addr %s397, 256
        %s399 = scalar_lea.vmem [#allocation2], %s398
        %p400 = pneg %p75
        %p401 = pneg %p72
        %s402 = sand.u32 %s33, 1
        %s403 = scalar_lea.sflag [#allocation6], %s402
        %s404 = sand.u32 %s88, 1
        %s405 = smul.addr %s404, 128
        %s406 = scalar_lea.vmem [#allocation5], %s405
        %p407 = pneg %p101
        %p408 = pneg %p98
        %s409 = sand.u32 %s33, 1
        %s410 = scalar_lea.sflag [#allocation6], %s409
        %s411 = sand.u32 %s114, 1
        %s412 = smul.addr %s411, 128
        %s413 = scalar_lea.vmem [#allocation7], %s412
        %p414 = pneg %p127
        %p415 = pneg %p124
        %s416 = sand.u32 %s140, 1
        %s417 = scalar_lea.sflag [#allocation9], %s416
        %s418 = sand.u32 %s140, 1
        %s419 = smul.addr %s418, 128
        %s420 = scalar_lea.vmem [#allocation8], %s419
        %p421 = pneg %p153
        %p422 = pneg %p150
        %p423 = pneg %p183
        %p424 = pneg %p180
        %s425 = sand.u32 %s170, 1
        %s426 = scalar_lea.sflag [#allocation4], %s425
        %s427 = sand.u32 %s170, 1
        %s428 = smul.addr %s427, 128
        %s429 = scalar_lea.vmem [#allocation10], %s428
        %p430 = pneg %p213
        %p431 = pneg %p210
        %s432 = sand.u32 %s33, 1
        %s433 = scalar_lea.sflag [#allocation12], %s432
        %s434 = sand.u32 %s200, 1
        %s435 = smul.addr %s434, 128
        %s436 = scalar_lea.vmem [#allocation11], %s435
        %p437 = pneg %p243
        %p438 = pneg %p240
        %s439 = sand.u32 %s33, 1
        %s440 = scalar_lea.sflag [#allocation12], %s439
        %s441 = sand.u32 %s230, 1
        %s442 = smul.addr %s441, 128
        %s443 = scalar_lea.vmem [#allocation13], %s442
        %s444 = smul.u32 32, %s40
        %s445 = smul.u32 16, %s38
        %s446 = smul.u32 16, %s38
        %s447 = smul.u32 16, %s38
        %s448 = smul.u32 16, %s38
        %s449 = smul.u32 2, %s40
        %s450 = smul.u32 32, %s40
        %s451 = smul.u32 32, %s40
        %v453 = vld [vmem:[%s363] sm:$0xff]
        %v454 = vld [vmem:[%s363 + $0x8] sm:$0xff]
        %v455 = vld [vmem:[%s363 + $0x10] sm:$0xff]
        %v456 = vld [vmem:[%s363 + $0x18] sm:$0xff]
        %v457 = vld [vmem:[%s363 + $0x20] sm:$0xff]
        %v458 = vld [vmem:[%s363 + $0x28] sm:$0xff]
        %v459 = vld [vmem:[%s363 + $0x30] sm:$0xff]
        %v460 = vld [vmem:[%s363 + $0x38] sm:$0xff]
        %v461 = vld [vmem:[%s363 + $0x40] sm:$0xff]
        %v462 = vld [vmem:[%s363 + $0x48] sm:$0xff]
        %v463 = vld [vmem:[%s363 + $0x50] sm:$0xff]
        %v464 = vld [vmem:[%s363 + $0x58] sm:$0xff]
        %v465 = vld [vmem:[%s363 + $0x60] sm:$0xff]
        %v466 = vld [vmem:[%s363 + $0x68] sm:$0xff]
        %v467 = vld [vmem:[%s363 + $0x70] sm:$0xff]
        %v468 = vld [vmem:[%s363 + $0x78] sm:$0xff]
        %v469 = vld [vmem:[%s363 + $0x80] sm:$0xff]
        %v470 = vld [vmem:[%s363 + $0x88] sm:$0xff]
        %v471 = vld [vmem:[%s363 + $0x90] sm:$0xff]
        %v472 = vld [vmem:[%s363 + $0x98] sm:$0xff]
        %v473 = vld [vmem:[%s363 + $0xa0] sm:$0xff]
        %v474 = vld [vmem:[%s363 + $0xa8] sm:$0xff]
        %v475 = vld [vmem:[%s363 + $0xb0] sm:$0xff]
        %v476 = vld [vmem:[%s363 + $0xb8] sm:$0xff]
        %v477 = vld [vmem:[%s363 + $0xc0] sm:$0xff]
        %v478 = vld [vmem:[%s363 + $0xc8] sm:$0xff]
        %v479 = vld [vmem:[%s363 + $0xd0] sm:$0xff]
        %v480 = vld [vmem:[%s363 + $0xd8] sm:$0xff]
        %v481 = vld [vmem:[%s363 + $0xe0] sm:$0xff]
        %v482 = vld [vmem:[%s363 + $0xe8] sm:$0xff]
        %v483 = vld [vmem:[%s363 + $0xf0] sm:$0xff]
        %v484 = vld [vmem:[%s363 + $0xf8] sm:$0xff]
        %v485 = vld [vmem:[%s372] sm:$0xff]
        %v486 = vld [vmem:[%s372 + $0x8] sm:$0xff]
        %v487 = vld [vmem:[%s372 + $0x10] sm:$0xff]
        %v488 = vld [vmem:[%s372 + $0x18] sm:$0xff]
        %v489 = vld [vmem:[%s372 + $0x20] sm:$0xff]
        %v490 = vld [vmem:[%s372 + $0x28] sm:$0xff]
        %v491 = vld [vmem:[%s372 + $0x30] sm:$0xff]
        %v492 = vld [vmem:[%s372 + $0x38] sm:$0xff]
        %v493 = vld [vmem:[%s372 + $0x40] sm:$0xff]
        %v494 = vld [vmem:[%s372 + $0x48] sm:$0xff]
        %v495 = vld [vmem:[%s372 + $0x50] sm:$0xff]
        %v496 = vld [vmem:[%s372 + $0x58] sm:$0xff]
        %v497 = vld [vmem:[%s372 + $0x60] sm:$0xff]
        %v498 = vld [vmem:[%s372 + $0x68] sm:$0xff]
        %v499 = vld [vmem:[%s372 + $0x70] sm:$0xff]
        %v500 = vld [vmem:[%s372 + $0x78] sm:$0xff]
        %v517 = vunpack.c.l.b16 %v485
        %v518 = vunpack.c.h.b16 %v485
        %v519 = vunpack.c.l.b16 %v486
        %v520 = vunpack.c.h.b16 %v486
        %v521 = vunpack.c.l.b16 %v487
        %v522 = vunpack.c.h.b16 %v487
        %v523 = vunpack.c.l.b16 %v488
        %v524 = vunpack.c.h.b16 %v488
        %v525 = vunpack.c.l.b16 %v489
        %v526 = vunpack.c.h.b16 %v489
        %v527 = vunpack.c.l.b16 %v490
        %v528 = vunpack.c.h.b16 %v490
        %v529 = vunpack.c.l.b16 %v491
        %v530 = vunpack.c.h.b16 %v491
        %v531 = vunpack.c.l.b16 %v492
        %v532 = vunpack.c.h.b16 %v492
        %v533 = vunpack.c.l.b16 %v493
        %v534 = vunpack.c.h.b16 %v493
        %v535 = vunpack.c.l.b16 %v494
        %v536 = vunpack.c.h.b16 %v494
        %v537 = vunpack.c.l.b16 %v495
        %v538 = vunpack.c.h.b16 %v495
        %v539 = vunpack.c.l.b16 %v496
        %v540 = vunpack.c.h.b16 %v496
        %v541 = vunpack.c.l.b16 %v497
        %v542 = vunpack.c.h.b16 %v497
        %v543 = vunpack.c.l.b16 %v498
        %v544 = vunpack.c.h.b16 %v498
        %v545 = vunpack.c.l.b16 %v499
        %v546 = vunpack.c.h.b16 %v499
        %v547 = vunpack.c.l.b16 %v500
        %v548 = vunpack.c.h.b16 %v500
        %v549 = vpack.c.b16 %v519, %v517
        %v550 = vpack.c.b16 %v520, %v518
        %v551 = vpack.c.b16 %v523, %v521
        %v552 = vpack.c.b16 %v524, %v522
        %v553 = vpack.c.b16 %v527, %v525
        %v554 = vpack.c.b16 %v528, %v526
        %v555 = vpack.c.b16 %v531, %v529
        %v556 = vpack.c.b16 %v532, %v530
        %v557 = vpack.c.b16 %v535, %v533
        %v558 = vpack.c.b16 %v536, %v534
        %v559 = vpack.c.b16 %v539, %v537
        %v560 = vpack.c.b16 %v540, %v538
        %v561 = vpack.c.b16 %v543, %v541
        %v562 = vpack.c.b16 %v544, %v542
        %v563 = vpack.c.b16 %v547, %v545
        %v564 = vpack.c.b16 %v548, %v546
        %v613 = vunpack.c.l.b16 %v453
        %v614 = vunpack.c.h.b16 %v453
        %v615 = vunpack.c.l.b16 %v454
        %v616 = vunpack.c.h.b16 %v454
        %v617 = vunpack.c.l.b16 %v455
        %v618 = vunpack.c.h.b16 %v455
        %v619 = vunpack.c.l.b16 %v456
        %v620 = vunpack.c.h.b16 %v456
        %v621 = vunpack.c.l.b16 %v457
        %v622 = vunpack.c.h.b16 %v457
        %v623 = vunpack.c.l.b16 %v458
        %v624 = vunpack.c.h.b16 %v458
        %v625 = vunpack.c.l.b16 %v459
        %v626 = vunpack.c.h.b16 %v459
        %v627 = vunpack.c.l.b16 %v460
        %v628 = vunpack.c.h.b16 %v460
        %v629 = vunpack.c.l.b16 %v461
        %v630 = vunpack.c.h.b16 %v461
        %v631 = vunpack.c.l.b16 %v462
        %v632 = vunpack.c.h.b16 %v462
        %v633 = vunpack.c.l.b16 %v463
        %v634 = vunpack.c.h.b16 %v463
        %v635 = vunpack.c.l.b16 %v464
        %v636 = vunpack.c.h.b16 %v464
        %v637 = vunpack.c.l.b16 %v465
        %v638 = vunpack.c.h.b16 %v465
        %v639 = vunpack.c.l.b16 %v466
        %v640 = vunpack.c.h.b16 %v466
        %v641 = vunpack.c.l.b16 %v467
        %v642 = vunpack.c.h.b16 %v467
        %v643 = vunpack.c.l.b16 %v468
        %v644 = vunpack.c.h.b16 %v468
        %v645 = vunpack.c.l.b16 %v469
        %v646 = vunpack.c.h.b16 %v469
        %v647 = vunpack.c.l.b16 %v470
        %v648 = vunpack.c.h.b16 %v470
        %v649 = vunpack.c.l.b16 %v471
        %v650 = vunpack.c.h.b16 %v471
        %v651 = vunpack.c.l.b16 %v472
        %v652 = vunpack.c.h.b16 %v472
        %v653 = vunpack.c.l.b16 %v473
        %v654 = vunpack.c.h.b16 %v473
        %v655 = vunpack.c.l.b16 %v474
        %v656 = vunpack.c.h.b16 %v474
        %v657 = vunpack.c.l.b16 %v475
        %v658 = vunpack.c.h.b16 %v475
        %v659 = vunpack.c.l.b16 %v476
        %v660 = vunpack.c.h.b16 %v476
        %v661 = vunpack.c.l.b16 %v477
        %v662 = vunpack.c.h.b16 %v477
        %v663 = vunpack.c.l.b16 %v478
        %v664 = vunpack.c.h.b16 %v478
        %v665 = vunpack.c.l.b16 %v479
        %v666 = vunpack.c.h.b16 %v479
        %v667 = vunpack.c.l.b16 %v480
        %v668 = vunpack.c.h.b16 %v480
        %v669 = vunpack.c.l.b16 %v481
        %v670 = vunpack.c.h.b16 %v481
        %v671 = vunpack.c.l.b16 %v482
        %v672 = vunpack.c.h.b16 %v482
        %v673 = vunpack.c.l.b16 %v483
        %v674 = vunpack.c.h.b16 %v483
        %v675 = vunpack.c.l.b16 %v484
        %v676 = vunpack.c.h.b16 %v484
        %v677 = vpack.c.b16 %v615, %v613
        %v678 = vpack.c.b16 %v616, %v614
        %v679 = vpack.c.b16 %v619, %v617
        %v680 = vpack.c.b16 %v620, %v618
        %v681 = vpack.c.b16 %v623, %v621
        %v682 = vpack.c.b16 %v624, %v622
        %v683 = vpack.c.b16 %v627, %v625
        %v684 = vpack.c.b16 %v628, %v626
        %v685 = vpack.c.b16 %v631, %v629
        %v686 = vpack.c.b16 %v632, %v630
        %v687 = vpack.c.b16 %v635, %v633
        %v688 = vpack.c.b16 %v636, %v634
        %v689 = vpack.c.b16 %v639, %v637
        %v690 = vpack.c.b16 %v640, %v638
        %v691 = vpack.c.b16 %v643, %v641
        %v692 = vpack.c.b16 %v644, %v642
        %v693 = vpack.c.b16 %v647, %v645
        %v694 = vpack.c.b16 %v648, %v646
        %v695 = vpack.c.b16 %v651, %v649
        %v696 = vpack.c.b16 %v652, %v650
        %v697 = vpack.c.b16 %v655, %v653
        %v698 = vpack.c.b16 %v656, %v654
        %v699 = vpack.c.b16 %v659, %v657
        %v700 = vpack.c.b16 %v660, %v658
        %v701 = vpack.c.b16 %v663, %v661
        %v702 = vpack.c.b16 %v664, %v662
        %v703 = vpack.c.b16 %v667, %v665
        %v704 = vpack.c.b16 %v668, %v666
        %v705 = vpack.c.b16 %v671, %v669
        %v706 = vpack.c.b16 %v672, %v670
        %v707 = vpack.c.b16 %v675, %v673
        %v708 = vpack.c.b16 %v676, %v674
        %741 = vmatprep.subr.bf16.mxu0 %v678
        %742 = vmatpush1.bf16.xpose.msra.mxu0 %v677
        %743 = vmatprep.subr.bf16.mxu0 %v680
        %744 = vmatpush1.bf16.xpose.msra.mxu0 %v679
        %745 = vmatprep.subr.bf16.mxu0 %v682
        %746 = vmatpush1.bf16.xpose.msra.mxu0 %v681
        %747 = vmatprep.subr.bf16.mxu0 %v684
        %748 = vmatpush1.bf16.xpose.msra.mxu0 %v683
        %749 = vmatprep.subr.bf16.mxu0 %v686
        %750 = vmatpush1.bf16.xpose.msra.mxu0 %v685
        %751 = vmatprep.subr.bf16.mxu0 %v688
        %752 = vmatpush1.bf16.xpose.msra.mxu0 %v687
        %753 = vmatprep.subr.bf16.mxu0 %v690
        %754 = vmatpush1.bf16.xpose.msra.mxu0 %v689
        %755 = vmatprep.subr.bf16.mxu0 %v692
        %756 = vmatpush1.bf16.xpose.msra.mxu0 %v691
        %757 = vmatprep.subr.bf16.mxu0 %v694
        %758 = vmatpush1.bf16.xpose.msra.mxu0 %v693
        %759 = vmatprep.subr.bf16.mxu0 %v696
        %760 = vmatpush1.bf16.xpose.msra.mxu0 %v695
        %761 = vmatprep.subr.bf16.mxu0 %v698
        %762 = vmatpush1.bf16.xpose.msra.mxu0 %v697
        %763 = vmatprep.subr.bf16.mxu0 %v700
        %764 = vmatpush1.bf16.xpose.msra.mxu0 %v699
        %765 = vmatprep.subr.bf16.mxu0 %v702
        %766 = vmatpush1.bf16.xpose.msra.mxu0 %v701
        %767 = vmatprep.subr.bf16.mxu0 %v704
        %768 = vmatpush1.bf16.xpose.msra.mxu0 %v703
        %769 = vmatprep.subr.bf16.mxu0 %v706
        %770 = vmatpush1.bf16.xpose.msra.mxu0 %v705
        %771 = vmatprep.subr.bf16.mxu0 %v708
        %772 = vmatpush1.bf16.xpose.msra.mxu0 %v707
        %773 = vmatprep.mubr.bf16.mxu0 %v550
        %774 = vmatmul.mubr.bf16.gmra.mrb[0].mxu0 %v549
        %v775 = vpop.f32.mrb[0].mxu0
        %v776 = vadd.f32 0.0, %v775
        %v777 = vpop.f32.mrb[0].mxu0
        %v778 = vadd.f32 0.0, %v777
        %v779 = vpop.f32.mrb[0].mxu0
        %v780 = vadd.f32 0.0, %v779
        %v781 = vpop.f32.mrb[0].mxu0
        %v782 = vadd.f32 0.0, %v781
        %783 = vmatprep.mubr.bf16.mxu0 %v552
        %784 = vmatmul.mubr.bf16.gmra.mrb[0].mxu0 %v551
        %v785 = vpop.f32.mrb[0].mxu0
        %v786 = vadd.f32 0.0, %v785
        %v787 = vpop.f32.mrb[0].mxu0
        %v788 = vadd.f32 0.0, %v787
        %v789 = vpop.f32.mrb[0].mxu0
        %v790 = vadd.f32 0.0, %v789
        %v791 = vpop.f32.mrb[0].mxu0
        %v792 = vadd.f32 0.0, %v791
        %793 = vmatprep.mubr.bf16.mxu0 %v554
        %794 = vmatmul.mubr.bf16.gmra.mrb[0].mxu0 %v553
        %v795 = vpop.f32.mrb[0].mxu0
        %v796 = vadd.f32 0.0, %v795
        %v797 = vpop.f32.mrb[0].mxu0
        %v798 = vadd.f32 0.0, %v797
        %v799 = vpop.f32.mrb[0].mxu0
        %v800 = vadd.f32 0.0, %v799
        %v801 = vpop.f32.mrb[0].mxu0
        %v802 = vadd.f32 0.0, %v801
        %803 = vmatprep.mubr.bf16.mxu0 %v556
        %804 = vmatmul.mubr.bf16.gmra.mrb[0].mxu0 %v555
        %v805 = vpop.f32.mrb[0].mxu0
        %v806 = vadd.f32 0.0, %v805
        %v807 = vpop.f32.mrb[0].mxu0
        %v808 = vadd.f32 0.0, %v807
        %v809 = vpop.f32.mrb[0].mxu0
        %v810 = vadd.f32 0.0, %v809
        %v811 = vpop.f32.mrb[0].mxu0
        %v812 = vadd.f32 0.0, %v811
        %813 = vmatprep.mubr.bf16.mxu0 %v558
        %814 = vmatmul.mubr.bf16.gmra.mrb[0].mxu0 %v557
        %v815 = vpop.f32.mrb[0].mxu0
        %v816 = vadd.f32 0.0, %v815
        %v817 = vpop.f32.mrb[0].mxu0
        %v818 = vadd.f32 0.0, %v817
        %v819 = vpop.f32.mrb[0].mxu0
        %v820 = vadd.f32 0.0, %v819
        %v821 = vpop.f32.mrb[0].mxu0
        %v822 = vadd.f32 0.0, %v821
        %823 = vmatprep.mubr.bf16.mxu0 %v560
        %824 = vmatmul.mubr.bf16.gmra.mrb[0].mxu0 %v559
        %v825 = vpop.f32.mrb[0].mxu0
        %v826 = vadd.f32 0.0, %v825
        %v827 = vpop.f32.mrb[0].mxu0
        %v828 = vadd.f32 0.0, %v827
        %v829 = vpop.f32.mrb[0].mxu0
        %v830 = vadd.f32 0.0, %v829
        %v831 = vpop.f32.mrb[0].mxu0
        %v832 = vadd.f32 0.0, %v831
        %833 = vmatprep.mubr.bf16.mxu0 %v562
        %834 = vmatmul.mubr.bf16.gmra.mrb[0].mxu0 %v561
        %v835 = vpop.f32.mrb[0].mxu0
        %v836 = vadd.f32 0.0, %v835
        %v837 = vpop.f32.mrb[0].mxu0
        %v838 = vadd.f32 0.0, %v837
        %v839 = vpop.f32.mrb[0].mxu0
        %v840 = vadd.f32 0.0, %v839
        %v841 = vpop.f32.mrb[0].mxu0
        %v842 = vadd.f32 0.0, %v841
        %843 = vmatprep.mubr.bf16.mxu0 %v564
        %844 = vmatmul.mubr.bf16.gmra.mrb[0].mxu0 %v563
        %v845 = vpop.f32.mrb[0].mxu0
        %v846 = vadd.f32 0.0, %v845
        %v847 = vpop.f32.mrb[0].mxu0
        %v848 = vadd.f32 0.0, %v847
        %v849 = vpop.f32.mrb[0].mxu0
        %v850 = vadd.f32 0.0, %v849
        %v851 = vpop.f32.mrb[0].mxu0
        %v852 = vadd.f32 0.0, %v851
        %853 = vdwg.mxu0
        %v854 = vpack.c.bf16 %v780, %v776
        %v855 = vpack.c.bf16 %v782, %v778
        %v856 = vpack.c.bf16 %v790, %v786
        %v857 = vpack.c.bf16 %v792, %v788
        %v858 = vpack.c.bf16 %v800, %v796
        %v859 = vpack.c.bf16 %v802, %v798
        %v860 = vpack.c.bf16 %v810, %v806
        %v861 = vpack.c.bf16 %v812, %v808
        %v862 = vpack.c.bf16 %v820, %v816
        %v863 = vpack.c.bf16 %v822, %v818
        %v864 = vpack.c.bf16 %v830, %v826
        %v865 = vpack.c.bf16 %v832, %v828
        %v866 = vpack.c.bf16 %v840, %v836
        %v867 = vpack.c.bf16 %v842, %v838
        %v868 = vpack.c.bf16 %v850, %v846
        %v869 = vpack.c.bf16 %v852, %v848
        %v886 = vunpack.c.l.b16 %v854
        %v887 = vunpack.c.l.b16 %v855
        %v888 = vunpack.c.h.b16 %v854
        %v889 = vunpack.c.h.b16 %v855
        %v890 = vunpack.c.l.b16 %v856
        %v891 = vunpack.c.l.b16 %v857
        %v892 = vunpack.c.h.b16 %v856
        %v893 = vunpack.c.h.b16 %v857
        %v894 = vunpack.c.l.b16 %v858
        %v895 = vunpack.c.l.b16 %v859
        %v896 = vunpack.c.h.b16 %v858
        %v897 = vunpack.c.h.b16 %v859
        %v898 = vunpack.c.l.b16 %v860
        %v899 = vunpack.c.l.b16 %v861
        %v900 = vunpack.c.h.b16 %v860
        %v901 = vunpack.c.h.b16 %v861
        %v902 = vunpack.c.l.b16 %v862
        %v903 = vunpack.c.l.b16 %v863
        %v904 = vunpack.c.h.b16 %v862
        %v905 = vunpack.c.h.b16 %v863
        %v906 = vunpack.c.l.b16 %v864
        %v907 = vunpack.c.l.b16 %v865
        %v908 = vunpack.c.h.b16 %v864
        %v909 = vunpack.c.h.b16 %v865
        %v910 = vunpack.c.l.b16 %v866
        %v911 = vunpack.c.l.b16 %v867
        %v912 = vunpack.c.h.b16 %v866
        %v913 = vunpack.c.h.b16 %v867
        %v914 = vunpack.c.l.b16 %v868
        %v915 = vunpack.c.l.b16 %v869
        %v916 = vunpack.c.h.b16 %v868
        %v917 = vunpack.c.h.b16 %v869
        %v918 = vpack.c.b16 %v887, %v886
        %v919 = vpack.c.b16 %v889, %v888
        %v920 = vpack.c.b16 %v891, %v890
        %v921 = vpack.c.b16 %v893, %v892
        %v922 = vpack.c.b16 %v895, %v894
        %v923 = vpack.c.b16 %v897, %v896
        %v924 = vpack.c.b16 %v899, %v898
        %v925 = vpack.c.b16 %v901, %v900
        %v926 = vpack.c.b16 %v903, %v902
        %v927 = vpack.c.b16 %v905, %v904
        %v928 = vpack.c.b16 %v907, %v906
        %v929 = vpack.c.b16 %v909, %v908
        %v930 = vpack.c.b16 %v911, %v910
        %v931 = vpack.c.b16 %v913, %v912
        %v932 = vpack.c.b16 %v915, %v914
        %v933 = vpack.c.b16 %v917, %v916
        %950 = vst [vmem:[%s429] sm:$0xff] %v918
        %951 = vst [vmem:[%s429 + $0x8] sm:$0xff] %v919
        %952 = vst [vmem:[%s429 + $0x10] sm:$0xff] %v920
        %953 = vst [vmem:[%s429 + $0x18] sm:$0xff] %v921
        %954 = vst [vmem:[%s429 + $0x20] sm:$0xff] %v922
        %955 = vst [vmem:[%s429 + $0x28] sm:$0xff] %v923
        %956 = vst [vmem:[%s429 + $0x30] sm:$0xff] %v924
        %957 = vst [vmem:[%s429 + $0x38] sm:$0xff] %v925
        %958 = vst [vmem:[%s429 + $0x40] sm:$0xff] %v926
        %959 = vst [vmem:[%s429 + $0x48] sm:$0xff] %v927
        %960 = vst [vmem:[%s429 + $0x50] sm:$0xff] %v928
        %961 = vst [vmem:[%s429 + $0x58] sm:$0xff] %v929
        %962 = vst [vmem:[%s429 + $0x60] sm:$0xff] %v930
        %963 = vst [vmem:[%s429 + $0x68] sm:$0xff] %v931
        %964 = vst [vmem:[%s429 + $0x70] sm:$0xff] %v932
        %965 = vst [vmem:[%s429 + $0x78] sm:$0xff] %v933
        %v966 = vld [vmem:[%s381] sm:$0xff]
        %v967 = vld [vmem:[%s381 + $0x8] sm:$0xff]
        %v968 = vld [vmem:[%s381 + $0x10] sm:$0xff]
        %v969 = vld [vmem:[%s381 + $0x18] sm:$0xff]
        %v970 = vld [vmem:[%s381 + $0x20] sm:$0xff]
        %v971 = vld [vmem:[%s381 + $0x28] sm:$0xff]
        %v972 = vld [vmem:[%s381 + $0x30] sm:$0xff]
        %v973 = vld [vmem:[%s381 + $0x38] sm:$0xff]
        %v974 = vld [vmem:[%s381 + $0x40] sm:$0xff]
        %v975 = vld [vmem:[%s381 + $0x48] sm:$0xff]
        %v976 = vld [vmem:[%s381 + $0x50] sm:$0xff]
        %v977 = vld [vmem:[%s381 + $0x58] sm:$0xff]
        %v978 = vld [vmem:[%s381 + $0x60] sm:$0xff]
        %v979 = vld [vmem:[%s381 + $0x68] sm:$0xff]
        %v980 = vld [vmem:[%s381 + $0x70] sm:$0xff]
        %v981 = vld [vmem:[%s381 + $0x78] sm:$0xff]
        %v998 = vunpack.c.l.b16 %v966
        %v999 = vunpack.c.h.b16 %v966
        %v1000 = vunpack.c.l.b16 %v967
        %v1001 = vunpack.c.h.b16 %v967
        %v1002 = vunpack.c.l.b16 %v968
        %v1003 = vunpack.c.h.b16 %v968
        %v1004 = vunpack.c.l.b16 %v969
        %v1005 = vunpack.c.h.b16 %v969
        %v1006 = vunpack.c.l.b16 %v970
        %v1007 = vunpack.c.h.b16 %v970
        %v1008 = vunpack.c.l.b16 %v971
        %v1009 = vunpack.c.h.b16 %v971
        %v1010 = vunpack.c.l.b16 %v972
        %v1011 = vunpack.c.h.b16 %v972
        %v1012 = vunpack.c.l.b16 %v973
        %v1013 = vunpack.c.h.b16 %v973
        %v1014 = vunpack.c.l.b16 %v974
        %v1015 = vunpack.c.h.b16 %v974
        %v1016 = vunpack.c.l.b16 %v975
        %v1017 = vunpack.c.h.b16 %v975
        %v1018 = vunpack.c.l.b16 %v976
        %v1019 = vunpack.c.h.b16 %v976
        %v1020 = vunpack.c.l.b16 %v977
        %v1021 = vunpack.c.h.b16 %v977
        %v1022 = vunpack.c.l.b16 %v978
        %v1023 = vunpack.c.h.b16 %v978
        %v1024 = vunpack.c.l.b16 %v979
        %v1025 = vunpack.c.h.b16 %v979
        %v1026 = vunpack.c.l.b16 %v980
        %v1027 = vunpack.c.h.b16 %v980
        %v1028 = vunpack.c.l.b16 %v981
        %v1029 = vunpack.c.h.b16 %v981
        %v1030 = vpack.c.b16 %v1000, %v998
        %v1031 = vpack.c.b16 %v1001, %v999
        %v1032 = vpack.c.b16 %v1004, %v1002
        %v1033 = vpack.c.b16 %v1005, %v1003
        %v1034 = vpack.c.b16 %v1008, %v1006
        %v1035 = vpack.c.b16 %v1009, %v1007
        %v1036 = vpack.c.b16 %v1012, %v1010
        %v1037 = vpack.c.b16 %v1013, %v1011
        %v1038 = vpack.c.b16 %v1016, %v1014
        %v1039 = vpack.c.b16 %v1017, %v1015
        %v1040 = vpack.c.b16 %v1020, %v1018
        %v1041 = vpack.c.b16 %v1021, %v1019
        %v1042 = vpack.c.b16 %v1024, %v1022
        %v1043 = vpack.c.b16 %v1025, %v1023
        %v1044 = vpack.c.b16 %v1028, %v1026
        %v1045 = vpack.c.b16 %v1029, %v1027
        %1062 = vmatprep.subr.bf16.mxu0 %v1031
        %1063 = vmatpush1.bf16.xpose.msra.mxu0 %v1030
        %1064 = vmatprep.subr.bf16.mxu0 %v1033
        %1065 = vmatpush1.bf16.xpose.msra.mxu0 %v1032
        %1066 = vmatprep.subr.bf16.mxu0 %v1035
        %1067 = vmatpush1.bf16.xpose.msra.mxu0 %v1034
        %1068 = vmatprep.subr.bf16.mxu0 %v1037
        %1069 = vmatpush1.bf16.xpose.msra.mxu0 %v1036
        %1070 = vmatprep.subr.bf16.mxu0 %v1039
        %1071 = vmatpush1.bf16.xpose.msra.mxu0 %v1038
        %1072 = vmatprep.subr.bf16.mxu0 %v1041
        %1073 = vmatpush1.bf16.xpose.msra.mxu0 %v1040
        %1074 = vmatprep.subr.bf16.mxu0 %v1043
        %1075 = vmatpush1.bf16.xpose.msra.mxu0 %v1042
        %1076 = vmatprep.subr.bf16.mxu0 %v1045
        %1077 = vmatpush1.bf16.xpose.msra.mxu0 %v1044
        %1078 = vmatprep.subr.bf16.mxu0 0
        %1079 = vmatpush1.bf16.xpose.msra.mxu0 0
        %1080 = vmatprep.subr.bf16.mxu0 0
        %1081 = vmatpush1.bf16.xpose.msra.mxu0 0
        %1082 = vmatprep.subr.bf16.mxu0 0
        %1083 = vmatpush1.bf16.xpose.msra.mxu0 0
        %1084 = vmatprep.subr.bf16.mxu0 0
        %1085 = vmatpush1.bf16.xpose.msra.mxu0 0
        %1086 = vmatprep.subr.bf16.mxu0 0
        %1087 = vmatpush1.bf16.xpose.msra.mxu0 0
        %1088 = vmatprep.subr.bf16.mxu0 0
        %1089 = vmatpush1.bf16.xpose.msra.mxu0 0
        %1090 = vmatprep.subr.bf16.mxu0 0
        %1091 = vmatpush1.bf16.xpose.msra.mxu0 0
        %1092 = vmatprep.subr.bf16.mxu0 0
        %1093 = vmatpush1.bf16.xpose.msra.mxu0 0
        %1094 = vmatprep.mubr.bf16.mxu0 %v678
        %1095 = vmatmul.mubr.bf16.gmra.mrb[0].mxu0 %v677
        %v1096 = vpop.f32.mrb[0].mxu0
        %v1097 = vadd.f32 0.0, %v1096
        %v1098 = vpop.f32.mrb[0].mxu0
        %v1099 = vpop.f32.mrb[0].mxu0
        %v1100 = vadd.f32 0.0, %v1099
        %v1101 = vpop.f32.mrb[0].mxu0
        %1102 = vmatprep.mubr.bf16.mxu0 %v680
        %1103 = vmatmul.mubr.bf16.gmra.mrb[0].mxu0 %v679
        %v1104 = vpop.f32.mrb[0].mxu0
        %v1105 = vadd.f32 0.0, %v1104
        %v1106 = vpop.f32.mrb[0].mxu0
        %v1107 = vpop.f32.mrb[0].mxu0
        %v1108 = vadd.f32 0.0, %v1107
        %v1109 = vpop.f32.mrb[0].mxu0
        %1110 = vmatprep.mubr.bf16.mxu0 %v682
        %1111 = vmatmul.mubr.bf16.gmra.mrb[0].mxu0 %v681
        %v1112 = vpop.f32.mrb[0].mxu0
        %v1113 = vadd.f32 0.0, %v1112
        %v1114 = vpop.f32.mrb[0].mxu0
        %v1115 = vpop.f32.mrb[0].mxu0
        %v1116 = vadd.f32 0.0, %v1115
        %v1117 = vpop.f32.mrb[0].mxu0
        %1118 = vmatprep.mubr.bf16.mxu0 %v684
        %1119 = vmatmul.mubr.bf16.gmra.mrb[0].mxu0 %v683
        %v1120 = vpop.f32.mrb[0].mxu0
        %v1121 = vadd.f32 0.0, %v1120
        %v1122 = vpop.f32.mrb[0].mxu0
        %v1123 = vpop.f32.mrb[0].mxu0
        %v1124 = vadd.f32 0.0, %v1123
        %v1125 = vpop.f32.mrb[0].mxu0
        %1126 = vmatprep.mubr.bf16.mxu0 %v686
        %1127 = vmatmul.mubr.bf16.gmra.mrb[0].mxu0 %v685
        %v1128 = vpop.f32.mrb[0].mxu0
        %v1129 = vadd.f32 0.0, %v1128
        %v1130 = vpop.f32.mrb[0].mxu0
        %v1131 = vpop.f32.mrb[0].mxu0
        %v1132 = vadd.f32 0.0, %v1131
        %v1133 = vpop.f32.mrb[0].mxu0
        %1134 = vmatprep.mubr.bf16.mxu0 %v688
        %1135 = vmatmul.mubr.bf16.gmra.mrb[0].mxu0 %v687
        %v1136 = vpop.f32.mrb[0].mxu0
        %v1137 = vadd.f32 0.0, %v1136
        %v1138 = vpop.f32.mrb[0].mxu0
        %v1139 = vpop.f32.mrb[0].mxu0
        %v1140 = vadd.f32 0.0, %v1139
        %v1141 = vpop.f32.mrb[0].mxu0
        %1142 = vmatprep.mubr.bf16.mxu0 %v690
        %1143 = vmatmul.mubr.bf16.gmra.mrb[0].mxu0 %v689
        %v1144 = vpop.f32.mrb[0].mxu0
        %v1145 = vadd.f32 0.0, %v1144
        %v1146 = vpop.f32.mrb[0].mxu0
        %v1147 = vpop.f32.mrb[0].mxu0
        %v1148 = vadd.f32 0.0, %v1147
        %v1149 = vpop.f32.mrb[0].mxu0
        %1150 = vmatprep.mubr.bf16.mxu0 %v692
        %1151 = vmatmul.mubr.bf16.gmra.mrb[0].mxu0 %v691
        %v1152 = vpop.f32.mrb[0].mxu0
        %v1153 = vadd.f32 0.0, %v1152
        %v1154 = vpop.f32.mrb[0].mxu0
        %v1155 = vpop.f32.mrb[0].mxu0
        %v1156 = vadd.f32 0.0, %v1155
        %v1157 = vpop.f32.mrb[0].mxu0
        %1158 = vmatprep.mubr.bf16.mxu0 %v694
        %1159 = vmatmul.mubr.bf16.gmra.mrb[0].mxu0 %v693
        %v1160 = vpop.f32.mrb[0].mxu0
        %v1161 = vadd.f32 0.0, %v1160
        %v1162 = vpop.f32.mrb[0].mxu0
        %v1163 = vpop.f32.mrb[0].mxu0
        %v1164 = vadd.f32 0.0, %v1163
        %v1165 = vpop.f32.mrb[0].mxu0
        %1166 = vmatprep.mubr.bf16.mxu0 %v696
        %1167 = vmatmul.mubr.bf16.gmra.mrb[0].mxu0 %v695
        %v1168 = vpop.f32.mrb[0].mxu0
        %v1169 = vadd.f32 0.0, %v1168
        %v1170 = vpop.f32.mrb[0].mxu0
        %v1171 = vpop.f32.mrb[0].mxu0
        %v1172 = vadd.f32 0.0, %v1171
        %v1173 = vpop.f32.mrb[0].mxu0
        %1174 = vmatprep.mubr.bf16.mxu0 %v698
        %1175 = vmatmul.mubr.bf16.gmra.mrb[0].mxu0 %v697
        %v1176 = vpop.f32.mrb[0].mxu0
        %v1177 = vadd.f32 0.0, %v1176
        %v1178 = vpop.f32.mrb[0].mxu0
        %v1179 = vpop.f32.mrb[0].mxu0
        %v1180 = vadd.f32 0.0, %v1179
        %v1181 = vpop.f32.mrb[0].mxu0
        %1182 = vmatprep.mubr.bf16.mxu0 %v700
        %1183 = vmatmul.mubr.bf16.gmra.mrb[0].mxu0 %v699
        %v1184 = vpop.f32.mrb[0].mxu0
        %v1185 = vadd.f32 0.0, %v1184
        %v1186 = vpop.f32.mrb[0].mxu0
        %v1187 = vpop.f32.mrb[0].mxu0
        %v1188 = vadd.f32 0.0, %v1187
        %v1189 = vpop.f32.mrb[0].mxu0
        %1190 = vmatprep.mubr.bf16.mxu0 %v702
        %1191 = vmatmul.mubr.bf16.gmra.mrb[0].mxu0 %v701
        %v1192 = vpop.f32.mrb[0].mxu0
        %v1193 = vadd.f32 0.0, %v1192
        %v1194 = vpop.f32.mrb[0].mxu0
        %v1195 = vpop.f32.mrb[0].mxu0
        %v1196 = vadd.f32 0.0, %v1195
        %v1197 = vpop.f32.mrb[0].mxu0
        %1198 = vmatprep.mubr.bf16.mxu0 %v704
        %1199 = vmatmul.mubr.bf16.gmra.mrb[0].mxu0 %v703
        %v1200 = vpop.f32.mrb[0].mxu0
        %v1201 = vadd.f32 0.0, %v1200
        %v1202 = vpop.f32.mrb[0].mxu0
        %v1203 = vpop.f32.mrb[0].mxu0
        %v1204 = vadd.f32 0.0, %v1203
        %v1205 = vpop.f32.mrb[0].mxu0
        %1206 = vmatprep.mubr.bf16.mxu0 %v706
        %1207 = vmatmul.mubr.bf16.gmra.mrb[0].mxu0 %v705
        %v1208 = vpop.f32.mrb[0].mxu0
        %v1209 = vadd.f32 0.0, %v1208
        %v1210 = vpop.f32.mrb[0].mxu0
        %v1211 = vpop.f32.mrb[0].mxu0
        %v1212 = vadd.f32 0.0, %v1211
        %v1213 = vpop.f32.mrb[0].mxu0
        %1214 = vmatprep.mubr.bf16.mxu0 %v708
        %1215 = vmatmul.mubr.bf16.gmra.mrb[0].mxu0 %v707
        %v1216 = vpop.f32.mrb[0].mxu0
        %v1217 = vadd.f32 0.0, %v1216
        %v1218 = vpop.f32.mrb[0].mxu0
        %v1219 = vpop.f32.mrb[0].mxu0
        %v1220 = vadd.f32 0.0, %v1219
        %v1221 = vpop.f32.mrb[0].mxu0
        %1222 = vdwg.mxu0
        %v1223 = vpack.c.bf16 %v1100, %v1097
        %v1224 = vpack.c.bf16 %v1108, %v1105
        %v1225 = vpack.c.bf16 %v1116, %v1113
        %v1226 = vpack.c.bf16 %v1124, %v1121
        %v1227 = vpack.c.bf16 %v1132, %v1129
        %v1228 = vpack.c.bf16 %v1140, %v1137
        %v1229 = vpack.c.bf16 %v1148, %v1145
        %v1230 = vpack.c.bf16 %v1156, %v1153
        %v1231 = vpack.c.bf16 %v1164, %v1161
        %v1232 = vpack.c.bf16 %v1172, %v1169
        %v1233 = vpack.c.bf16 %v1180, %v1177
        %v1234 = vpack.c.bf16 %v1188, %v1185
        %v1235 = vpack.c.bf16 %v1196, %v1193
        %v1236 = vpack.c.bf16 %v1204, %v1201
        %v1237 = vpack.c.bf16 %v1212, %v1209
        %v1238 = vpack.c.bf16 %v1220, %v1217
        %v1255 = vunpack.c.l.b16 %v1223
        %v1256 = vunpack.c.h.b16 %v1223
        %v1257 = vunpack.c.l.b16 %v1224
        %v1258 = vunpack.c.h.b16 %v1224
        %v1259 = vunpack.c.l.b16 %v1225
        %v1260 = vunpack.c.h.b16 %v1225
        %v1261 = vunpack.c.l.b16 %v1226
        %v1262 = vunpack.c.h.b16 %v1226
        %v1263 = vunpack.c.l.b16 %v1227
        %v1264 = vunpack.c.h.b16 %v1227
        %v1265 = vunpack.c.l.b16 %v1228
        %v1266 = vunpack.c.h.b16 %v1228
        %v1267 = vunpack.c.l.b16 %v1229
        %v1268 = vunpack.c.h.b16 %v1229
        %v1269 = vunpack.c.l.b16 %v1230
        %v1270 = vunpack.c.h.b16 %v1230
        %v1271 = vunpack.c.l.b16 %v1231
        %v1272 = vunpack.c.h.b16 %v1231
        %v1273 = vunpack.c.l.b16 %v1232
        %v1274 = vunpack.c.h.b16 %v1232
        %v1275 = vunpack.c.l.b16 %v1233
        %v1276 = vunpack.c.h.b16 %v1233
        %v1277 = vunpack.c.l.b16 %v1234
        %v1278 = vunpack.c.h.b16 %v1234
        %v1279 = vunpack.c.l.b16 %v1235
        %v1280 = vunpack.c.h.b16 %v1235
        %v1281 = vunpack.c.l.b16 %v1236
        %v1282 = vunpack.c.h.b16 %v1236
        %v1283 = vunpack.c.l.b16 %v1237
        %v1284 = vunpack.c.h.b16 %v1237
        %v1285 = vunpack.c.l.b16 %v1238
        %v1286 = vunpack.c.h.b16 %v1238
        %v1287 = vpack.c.b16 %v1255, %v1255
        %v1288 = vpack.c.b16 %v1256, %v1256
        %v1289 = vpack.c.b16 %v1257, %v1257
        %v1290 = vpack.c.b16 %v1258, %v1258
        %v1291 = vpack.c.b16 %v1259, %v1259
        %v1292 = vpack.c.b16 %v1260, %v1260
        %v1293 = vpack.c.b16 %v1261, %v1261
        %v1294 = vpack.c.b16 %v1262, %v1262
        %v1295 = vpack.c.b16 %v1263, %v1263
        %v1296 = vpack.c.b16 %v1264, %v1264
        %v1297 = vpack.c.b16 %v1265, %v1265
        %v1298 = vpack.c.b16 %v1266, %v1266
        %v1299 = vpack.c.b16 %v1267, %v1267
        %v1300 = vpack.c.b16 %v1268, %v1268
        %v1301 = vpack.c.b16 %v1269, %v1269
        %v1302 = vpack.c.b16 %v1270, %v1270
        %v1303 = vpack.c.b16 %v1271, %v1271
        %v1304 = vpack.c.b16 %v1272, %v1272
        %v1305 = vpack.c.b16 %v1273, %v1273
        %v1306 = vpack.c.b16 %v1274, %v1274
        %v1307 = vpack.c.b16 %v1275, %v1275
        %v1308 = vpack.c.b16 %v1276, %v1276
        %v1309 = vpack.c.b16 %v1277, %v1277
        %v1310 = vpack.c.b16 %v1278, %v1278
        %v1311 = vpack.c.b16 %v1279, %v1279
        %v1312 = vpack.c.b16 %v1280, %v1280
        %v1313 = vpack.c.b16 %v1281, %v1281
        %v1314 = vpack.c.b16 %v1282, %v1282
        %v1315 = vpack.c.b16 %v1283, %v1283
        %v1316 = vpack.c.b16 %v1284, %v1284
        %v1317 = vpack.c.b16 %v1285, %v1285
        %v1318 = vpack.c.b16 %v1286, %v1286
        %1351 = vst [vmem:[%s436] sm:$0xf] %v1287
        %1352 = vst [vmem:[%s436 + $0x4] sm:$0xf] %v1288
        %1353 = vst [vmem:[%s436 + $0x8] sm:$0xf] %v1289
        %1354 = vst [vmem:[%s436 + $0xc] sm:$0xf] %v1290
        %1355 = vst [vmem:[%s436 + $0x10] sm:$0xf] %v1291
        %1356 = vst [vmem:[%s436 + $0x14] sm:$0xf] %v1292
        %1357 = vst [vmem:[%s436 + $0x18] sm:$0xf] %v1293
        %1358 = vst [vmem:[%s436 + $0x1c] sm:$0xf] %v1294
        %1359 = vst [vmem:[%s436 + $0x20] sm:$0xf] %v1295
        %1360 = vst [vmem:[%s436 + $0x24] sm:$0xf] %v1296
        %1361 = vst [vmem:[%s436 + $0x28] sm:$0xf] %v1297
        %1362 = vst [vmem:[%s436 + $0x2c] sm:$0xf] %v1298
        %1363 = vst [vmem:[%s436 + $0x30] sm:$0xf] %v1299
        %1364 = vst [vmem:[%s436 + $0x34] sm:$0xf] %v1300
        %1365 = vst [vmem:[%s436 + $0x38] sm:$0xf] %v1301
        %1366 = vst [vmem:[%s436 + $0x3c] sm:$0xf] %v1302
        %1367 = vst [vmem:[%s436 + $0x40] sm:$0xf] %v1303
        %1368 = vst [vmem:[%s436 + $0x44] sm:$0xf] %v1304
        %1369 = vst [vmem:[%s436 + $0x48] sm:$0xf] %v1305
        %1370 = vst [vmem:[%s436 + $0x4c] sm:$0xf] %v1306
        %1371 = vst [vmem:[%s436 + $0x50] sm:$0xf] %v1307
        %1372 = vst [vmem:[%s436 + $0x54] sm:$0xf] %v1308
        %1373 = vst [vmem:[%s436 + $0x58] sm:$0xf] %v1309
        %1374 = vst [vmem:[%s436 + $0x5c] sm:$0xf] %v1310
        %1375 = vst [vmem:[%s436 + $0x60] sm:$0xf] %v1311
        %1376 = vst [vmem:[%s436 + $0x64] sm:$0xf] %v1312
        %1377 = vst [vmem:[%s436 + $0x68] sm:$0xf] %v1313
        %1378 = vst [vmem:[%s436 + $0x6c] sm:$0xf] %v1314
        %1379 = vst [vmem:[%s436 + $0x70] sm:$0xf] %v1315
        %1380 = vst [vmem:[%s436 + $0x74] sm:$0xf] %v1316
        %1381 = vst [vmem:[%s436 + $0x78] sm:$0xf] %v1317
        %1382 = vst [vmem:[%s436 + $0x7c] sm:$0xf] %v1318
        %v1383 = vld [vmem:[%s390] sm:$0xff]
        %v1384 = vld [vmem:[%s390 + $0x8] sm:$0xff]
        %v1385 = vld [vmem:[%s390 + $0x10] sm:$0xff]
        %v1386 = vld [vmem:[%s390 + $0x18] sm:$0xff]
        %v1387 = vld [vmem:[%s390 + $0x20] sm:$0xff]
        %v1388 = vld [vmem:[%s390 + $0x28] sm:$0xff]
        %v1389 = vld [vmem:[%s390 + $0x30] sm:$0xff]
        %v1390 = vld [vmem:[%s390 + $0x38] sm:$0xff]
        %v1391 = vld [vmem:[%s390 + $0x40] sm:$0xff]
        %v1392 = vld [vmem:[%s390 + $0x48] sm:$0xff]
        %v1393 = vld [vmem:[%s390 + $0x50] sm:$0xff]
        %v1394 = vld [vmem:[%s390 + $0x58] sm:$0xff]
        %v1395 = vld [vmem:[%s390 + $0x60] sm:$0xff]
        %v1396 = vld [vmem:[%s390 + $0x68] sm:$0xff]
        %v1397 = vld [vmem:[%s390 + $0x70] sm:$0xff]
        %v1398 = vld [vmem:[%s390 + $0x78] sm:$0xff]
        %v1415 = vunpack.c.l.b16 %v1383
        %v1416 = vunpack.c.h.b16 %v1383
        %v1417 = vunpack.c.l.b16 %v1384
        %v1418 = vunpack.c.h.b16 %v1384
        %v1419 = vunpack.c.l.b16 %v1385
        %v1420 = vunpack.c.h.b16 %v1385
        %v1421 = vunpack.c.l.b16 %v1386
        %v1422 = vunpack.c.h.b16 %v1386
        %v1423 = vunpack.c.l.b16 %v1387
        %v1424 = vunpack.c.h.b16 %v1387
        %v1425 = vunpack.c.l.b16 %v1388
        %v1426 = vunpack.c.h.b16 %v1388
        %v1427 = vunpack.c.l.b16 %v1389
        %v1428 = vunpack.c.h.b16 %v1389
        %v1429 = vunpack.c.l.b16 %v1390
        %v1430 = vunpack.c.h.b16 %v1390
        %v1431 = vunpack.c.l.b16 %v1391
        %v1432 = vunpack.c.h.b16 %v1391
        %v1433 = vunpack.c.l.b16 %v1392
        %v1434 = vunpack.c.h.b16 %v1392
        %v1435 = vunpack.c.l.b16 %v1393
        %v1436 = vunpack.c.h.b16 %v1393
        %v1437 = vunpack.c.l.b16 %v1394
        %v1438 = vunpack.c.h.b16 %v1394
        %v1439 = vunpack.c.l.b16 %v1395
        %v1440 = vunpack.c.h.b16 %v1395
        %v1441 = vunpack.c.l.b16 %v1396
        %v1442 = vunpack.c.h.b16 %v1396
        %v1443 = vunpack.c.l.b16 %v1397
        %v1444 = vunpack.c.h.b16 %v1397
        %v1445 = vunpack.c.l.b16 %v1398
        %v1446 = vunpack.c.h.b16 %v1398
        %v1447 = vpack.c.b16 %v1417, %v1415
        %v1448 = vpack.c.b16 %v1418, %v1416
        %v1449 = vpack.c.b16 %v1421, %v1419
        %v1450 = vpack.c.b16 %v1422, %v1420
        %v1451 = vpack.c.b16 %v1425, %v1423
        %v1452 = vpack.c.b16 %v1426, %v1424
        %v1453 = vpack.c.b16 %v1429, %v1427
        %v1454 = vpack.c.b16 %v1430, %v1428
        %v1455 = vpack.c.b16 %v1433, %v1431
        %v1456 = vpack.c.b16 %v1434, %v1432
        %v1457 = vpack.c.b16 %v1437, %v1435
        %v1458 = vpack.c.b16 %v1438, %v1436
        %v1459 = vpack.c.b16 %v1441, %v1439
        %v1460 = vpack.c.b16 %v1442, %v1440
        %v1461 = vpack.c.b16 %v1445, %v1443
        %v1462 = vpack.c.b16 %v1446, %v1444
        %1479 = vmatprep.subr.bf16.mxu0 %v1448
        %1480 = vmatpush1.bf16.xpose.msra.mxu0 %v1447
        %1481 = vmatprep.subr.bf16.mxu0 %v1450
        %1482 = vmatpush1.bf16.xpose.msra.mxu0 %v1449
        %1483 = vmatprep.subr.bf16.mxu0 %v1452
        %1484 = vmatpush1.bf16.xpose.msra.mxu0 %v1451
        %1485 = vmatprep.subr.bf16.mxu0 %v1454
        %1486 = vmatpush1.bf16.xpose.msra.mxu0 %v1453
        %1487 = vmatprep.subr.bf16.mxu0 %v1456
        %1488 = vmatpush1.bf16.xpose.msra.mxu0 %v1455
        %1489 = vmatprep.subr.bf16.mxu0 %v1458
        %1490 = vmatpush1.bf16.xpose.msra.mxu0 %v1457
        %1491 = vmatprep.subr.bf16.mxu0 %v1460
        %1492 = vmatpush1.bf16.xpose.msra.mxu0 %v1459
        %1493 = vmatprep.subr.bf16.mxu0 %v1462
        %1494 = vmatpush1.bf16.xpose.msra.mxu0 %v1461
        %1495 = vmatprep.subr.bf16.mxu0 0
        %1496 = vmatpush1.bf16.xpose.msra.mxu0 0
        %1497 = vmatprep.subr.bf16.mxu0 0
        %1498 = vmatpush1.bf16.xpose.msra.mxu0 0
        %1499 = vmatprep.subr.bf16.mxu0 0
        %1500 = vmatpush1.bf16.xpose.msra.mxu0 0
        %1501 = vmatprep.subr.bf16.mxu0 0
        %1502 = vmatpush1.bf16.xpose.msra.mxu0 0
        %1503 = vmatprep.subr.bf16.mxu0 0
        %1504 = vmatpush1.bf16.xpose.msra.mxu0 0
        %1505 = vmatprep.subr.bf16.mxu0 0
        %1506 = vmatpush1.bf16.xpose.msra.mxu0 0
        %1507 = vmatprep.subr.bf16.mxu0 0
        %1508 = vmatpush1.bf16.xpose.msra.mxu0 0
        %1509 = vmatprep.subr.bf16.mxu0 0
        %1510 = vmatpush1.bf16.xpose.msra.mxu0 0
        %1511 = vmatprep.mubr.bf16.mxu0 %v678
        %1512 = vmatmul.mubr.bf16.gmra.mrb[0].mxu0 %v677
        %v1513 = vpop.f32.mrb[0].mxu0
        %v1514 = vadd.f32 0.0, %v1513
        %v1515 = vpop.f32.mrb[0].mxu0
        %v1516 = vpop.f32.mrb[0].mxu0
        %v1517 = vadd.f32 0.0, %v1516
        %v1518 = vpop.f32.mrb[0].mxu0
        %1519 = vmatprep.mubr.bf16.mxu0 %v680
        %1520 = vmatmul.mubr.bf16.gmra.mrb[0].mxu0 %v679
        %v1521 = vpop.f32.mrb[0].mxu0
        %v1522 = vadd.f32 0.0, %v1521
        %v1523 = vpop.f32.mrb[0].mxu0
        %v1524 = vpop.f32.mrb[0].mxu0
        %v1525 = vadd.f32 0.0, %v1524
        %v1526 = vpop.f32.mrb[0].mxu0
        %1527 = vmatprep.mubr.bf16.mxu0 %v682
        %1528 = vmatmul.mubr.bf16.gmra.mrb[0].mxu0 %v681
        %v1529 = vpop.f32.mrb[0].mxu0
        %v1530 = vadd.f32 0.0, %v1529
        %v1531 = vpop.f32.mrb[0].mxu0
        %v1532 = vpop.f32.mrb[0].mxu0
        %v1533 = vadd.f32 0.0, %v1532
        %v1534 = vpop.f32.mrb[0].mxu0
        %1535 = vmatprep.mubr.bf16.mxu0 %v684
        %1536 = vmatmul.mubr.bf16.gmra.mrb[0].mxu0 %v683
        %v1537 = vpop.f32.mrb[0].mxu0
        %v1538 = vadd.f32 0.0, %v1537
        %v1539 = vpop.f32.mrb[0].mxu0
        %v1540 = vpop.f32.mrb[0].mxu0
        %v1541 = vadd.f32 0.0, %v1540
        %v1542 = vpop.f32.mrb[0].mxu0
        %1543 = vmatprep.mubr.bf16.mxu0 %v686
        %1544 = vmatmul.mubr.bf16.gmra.mrb[0].mxu0 %v685
        %v1545 = vpop.f32.mrb[0].mxu0
        %v1546 = vadd.f32 0.0, %v1545
        %v1547 = vpop.f32.mrb[0].mxu0
        %v1548 = vpop.f32.mrb[0].mxu0
        %v1549 = vadd.f32 0.0, %v1548
        %v1550 = vpop.f32.mrb[0].mxu0
        %1551 = vmatprep.mubr.bf16.mxu0 %v688
        %1552 = vmatmul.mubr.bf16.gmra.mrb[0].mxu0 %v687
        %v1553 = vpop.f32.mrb[0].mxu0
        %v1554 = vadd.f32 0.0, %v1553
        %v1555 = vpop.f32.mrb[0].mxu0
        %v1556 = vpop.f32.mrb[0].mxu0
        %v1557 = vadd.f32 0.0, %v1556
        %v1558 = vpop.f32.mrb[0].mxu0
        %1559 = vmatprep.mubr.bf16.mxu0 %v690
        %1560 = vmatmul.mubr.bf16.gmra.mrb[0].mxu0 %v689
        %v1561 = vpop.f32.mrb[0].mxu0
        %v1562 = vadd.f32 0.0, %v1561
        %v1563 = vpop.f32.mrb[0].mxu0
        %v1564 = vpop.f32.mrb[0].mxu0
        %v1565 = vadd.f32 0.0, %v1564
        %v1566 = vpop.f32.mrb[0].mxu0
        %1567 = vmatprep.mubr.bf16.mxu0 %v692
        %1568 = vmatmul.mubr.bf16.gmra.mrb[0].mxu0 %v691
        %v1569 = vpop.f32.mrb[0].mxu0
        %v1570 = vadd.f32 0.0, %v1569
        %v1571 = vpop.f32.mrb[0].mxu0
        %v1572 = vpop.f32.mrb[0].mxu0
        %v1573 = vadd.f32 0.0, %v1572
        %v1574 = vpop.f32.mrb[0].mxu0
        %1575 = vmatprep.mubr.bf16.mxu0 %v694
        %1576 = vmatmul.mubr.bf16.gmra.mrb[0].mxu0 %v693
        %v1577 = vpop.f32.mrb[0].mxu0
        %v1578 = vadd.f32 0.0, %v1577
        %v1579 = vpop.f32.mrb[0].mxu0
        %v1580 = vpop.f32.mrb[0].mxu0
        %v1581 = vadd.f32 0.0, %v1580
        %v1582 = vpop.f32.mrb[0].mxu0
        %1583 = vmatprep.mubr.bf16.mxu0 %v696
        %1584 = vmatmul.mubr.bf16.gmra.mrb[0].mxu0 %v695
        %v1585 = vpop.f32.mrb[0].mxu0
        %v1586 = vadd.f32 0.0, %v1585
        %v1587 = vpop.f32.mrb[0].mxu0
        %v1588 = vpop.f32.mrb[0].mxu0
        %v1589 = vadd.f32 0.0, %v1588
        %v1590 = vpop.f32.mrb[0].mxu0
        %1591 = vmatprep.mubr.bf16.mxu0 %v698
        %1592 = vmatmul.mubr.bf16.gmra.mrb[0].mxu0 %v697
        %v1593 = vpop.f32.mrb[0].mxu0
        %v1594 = vadd.f32 0.0, %v1593
        %v1595 = vpop.f32.mrb[0].mxu0
        %v1596 = vpop.f32.mrb[0].mxu0
        %v1597 = vadd.f32 0.0, %v1596
        %v1598 = vpop.f32.mrb[0].mxu0
        %1599 = vmatprep.mubr.bf16.mxu0 %v700
        %1600 = vmatmul.mubr.bf16.gmra.mrb[0].mxu0 %v699
        %v1601 = vpop.f32.mrb[0].mxu0
        %v1602 = vadd.f32 0.0, %v1601
        %v1603 = vpop.f32.mrb[0].mxu0
        %v1604 = vpop.f32.mrb[0].mxu0
        %v1605 = vadd.f32 0.0, %v1604
        %v1606 = vpop.f32.mrb[0].mxu0
        %1607 = vmatprep.mubr.bf16.mxu0 %v702
        %1608 = vmatmul.mubr.bf16.gmra.mrb[0].mxu0 %v701
        %v1609 = vpop.f32.mrb[0].mxu0
        %v1610 = vadd.f32 0.0, %v1609
        %v1611 = vpop.f32.mrb[0].mxu0
        %v1612 = vpop.f32.mrb[0].mxu0
        %v1613 = vadd.f32 0.0, %v1612
        %v1614 = vpop.f32.mrb[0].mxu0
        %1615 = vmatprep.mubr.bf16.mxu0 %v704
        %1616 = vmatmul.mubr.bf16.gmra.mrb[0].mxu0 %v703
        %v1617 = vpop.f32.mrb[0].mxu0
        %v1618 = vadd.f32 0.0, %v1617
        %v1619 = vpop.f32.mrb[0].mxu0
        %v1620 = vpop.f32.mrb[0].mxu0
        %v1621 = vadd.f32 0.0, %v1620
        %v1622 = vpop.f32.mrb[0].mxu0
        %1623 = vmatprep.mubr.bf16.mxu0 %v706
        %1624 = vmatmul.mubr.bf16.gmra.mrb[0].mxu0 %v705
        %v1625 = vpop.f32.mrb[0].mxu0
        %v1626 = vadd.f32 0.0, %v1625
        %v1627 = vpop.f32.mrb[0].mxu0
        %v1628 = vpop.f32.mrb[0].mxu0
        %v1629 = vadd.f32 0.0, %v1628
        %v1630 = vpop.f32.mrb[0].mxu0
        %1631 = vmatprep.mubr.bf16.mxu0 %v708
        %1632 = vmatmul.mubr.bf16.gmra.mrb[0].mxu0 %v707
        %v1633 = vpop.f32.mrb[0].mxu0
        %v1634 = vadd.f32 0.0, %v1633
        %v1635 = vpop.f32.mrb[0].mxu0
        %v1636 = vpop.f32.mrb[0].mxu0
        %v1637 = vadd.f32 0.0, %v1636
        %v1638 = vpop.f32.mrb[0].mxu0
        %1639 = vdwg.mxu0
        %v1640 = vpack.c.bf16 %v1517, %v1514
        %v1641 = vpack.c.bf16 %v1525, %v1522
        %v1642 = vpack.c.bf16 %v1533, %v1530
        %v1643 = vpack.c.bf16 %v1541, %v1538
        %v1644 = vpack.c.bf16 %v1549, %v1546
        %v1645 = vpack.c.bf16 %v1557, %v1554
        %v1646 = vpack.c.bf16 %v1565, %v1562
        %v1647 = vpack.c.bf16 %v1573, %v1570
        %v1648 = vpack.c.bf16 %v1581, %v1578
        %v1649 = vpack.c.bf16 %v1589, %v1586
        %v1650 = vpack.c.bf16 %v1597, %v1594
        %v1651 = vpack.c.bf16 %v1605, %v1602
        %v1652 = vpack.c.bf16 %v1613, %v1610
        %v1653 = vpack.c.bf16 %v1621, %v1618
        %v1654 = vpack.c.bf16 %v1629, %v1626
        %v1655 = vpack.c.bf16 %v1637, %v1634
        %v1672 = vunpack.c.l.b16 %v1640
        %v1673 = vunpack.c.h.b16 %v1640
        %v1674 = vunpack.c.l.b16 %v1641
        %v1675 = vunpack.c.h.b16 %v1641
        %v1676 = vunpack.c.l.b16 %v1642
        %v1677 = vunpack.c.h.b16 %v1642
        %v1678 = vunpack.c.l.b16 %v1643
        %v1679 = vunpack.c.h.b16 %v1643
        %v1680 = vunpack.c.l.b16 %v1644
        %v1681 = vunpack.c.h.b16 %v1644
        %v1682 = vunpack.c.l.b16 %v1645
        %v1683 = vunpack.c.h.b16 %v1645
        %v1684 = vunpack.c.l.b16 %v1646
        %v1685 = vunpack.c.h.b16 %v1646
        %v1686 = vunpack.c.l.b16 %v1647
        %v1687 = vunpack.c.h.b16 %v1647
        %v1688 = vunpack.c.l.b16 %v1648
        %v1689 = vunpack.c.h.b16 %v1648
        %v1690 = vunpack.c.l.b16 %v1649
        %v1691 = vunpack.c.h.b16 %v1649
        %v1692 = vunpack.c.l.b16 %v1650
        %v1693 = vunpack.c.h.b16 %v1650
        %v1694 = vunpack.c.l.b16 %v1651
        %v1695 = vunpack.c.h.b16 %v1651
        %v1696 = vunpack.c.l.b16 %v1652
        %v1697 = vunpack.c.h.b16 %v1652
        %v1698 = vunpack.c.l.b16 %v1653
        %v1699 = vunpack.c.h.b16 %v1653
        %v1700 = vunpack.c.l.b16 %v1654
        %v1701 = vunpack.c.h.b16 %v1654
        %v1702 = vunpack.c.l.b16 %v1655
        %v1703 = vunpack.c.h.b16 %v1655
        %v1704 = vpack.c.b16 %v1672, %v1672
        %v1705 = vpack.c.b16 %v1673, %v1673
        %v1706 = vpack.c.b16 %v1674, %v1674
        %v1707 = vpack.c.b16 %v1675, %v1675
        %v1708 = vpack.c.b16 %v1676, %v1676
        %v1709 = vpack.c.b16 %v1677, %v1677
        %v1710 = vpack.c.b16 %v1678, %v1678
        %v1711 = vpack.c.b16 %v1679, %v1679
        %v1712 = vpack.c.b16 %v1680, %v1680
        %v1713 = vpack.c.b16 %v1681, %v1681
        %v1714 = vpack.c.b16 %v1682, %v1682
        %v1715 = vpack.c.b16 %v1683, %v1683
        %v1716 = vpack.c.b16 %v1684, %v1684
        %v1717 = vpack.c.b16 %v1685, %v1685
        %v1718 = vpack.c.b16 %v1686, %v1686
        %v1719 = vpack.c.b16 %v1687, %v1687
        %v1720 = vpack.c.b16 %v1688, %v1688
        %v1721 = vpack.c.b16 %v1689, %v1689
        %v1722 = vpack.c.b16 %v1690, %v1690
        %v1723 = vpack.c.b16 %v1691, %v1691
        %v1724 = vpack.c.b16 %v1692, %v1692
        %v1725 = vpack.c.b16 %v1693, %v1693
        %v1726 = vpack.c.b16 %v1694, %v1694
        %v1727 = vpack.c.b16 %v1695, %v1695
        %v1728 = vpack.c.b16 %v1696, %v1696
        %v1729 = vpack.c.b16 %v1697, %v1697
        %v1730 = vpack.c.b16 %v1698, %v1698
        %v1731 = vpack.c.b16 %v1699, %v1699
        %v1732 = vpack.c.b16 %v1700, %v1700
        %v1733 = vpack.c.b16 %v1701, %v1701
        %v1734 = vpack.c.b16 %v1702, %v1702
        %v1735 = vpack.c.b16 %v1703, %v1703
        %1768 = vst [vmem:[%s443] sm:$0xf] %v1704
        %1769 = vst [vmem:[%s443 + $0x4] sm:$0xf] %v1705
        %1770 = vst [vmem:[%s443 + $0x8] sm:$0xf] %v1706
        %1771 = vst [vmem:[%s443 + $0xc] sm:$0xf] %v1707
        %1772 = vst [vmem:[%s443 + $0x10] sm:$0xf] %v1708
        %1773 = vst [vmem:[%s443 + $0x14] sm:$0xf] %v1709
        %1774 = vst [vmem:[%s443 + $0x18] sm:$0xf] %v1710
        %1775 = vst [vmem:[%s443 + $0x1c] sm:$0xf] %v1711
        %1776 = vst [vmem:[%s443 + $0x20] sm:$0xf] %v1712
        %1777 = vst [vmem:[%s443 + $0x24] sm:$0xf] %v1713
        %1778 = vst [vmem:[%s443 + $0x28] sm:$0xf] %v1714
        %1779 = vst [vmem:[%s443 + $0x2c] sm:$0xf] %v1715
        %1780 = vst [vmem:[%s443 + $0x30] sm:$0xf] %v1716
        %1781 = vst [vmem:[%s443 + $0x34] sm:$0xf] %v1717
        %1782 = vst [vmem:[%s443 + $0x38] sm:$0xf] %v1718
        %1783 = vst [vmem:[%s443 + $0x3c] sm:$0xf] %v1719
        %1784 = vst [vmem:[%s443 + $0x40] sm:$0xf] %v1720
        %1785 = vst [vmem:[%s443 + $0x44] sm:$0xf] %v1721
        %1786 = vst [vmem:[%s443 + $0x48] sm:$0xf] %v1722
        %1787 = vst [vmem:[%s443 + $0x4c] sm:$0xf] %v1723
        %1788 = vst [vmem:[%s443 + $0x50] sm:$0xf] %v1724
        %1789 = vst [vmem:[%s443 + $0x54] sm:$0xf] %v1725
        %1790 = vst [vmem:[%s443 + $0x58] sm:$0xf] %v1726
        %1791 = vst [vmem:[%s443 + $0x5c] sm:$0xf] %v1727
        %1792 = vst [vmem:[%s443 + $0x60] sm:$0xf] %v1728
        %1793 = vst [vmem:[%s443 + $0x64] sm:$0xf] %v1729
        %1794 = vst [vmem:[%s443 + $0x68] sm:$0xf] %v1730
        %1795 = vst [vmem:[%s443 + $0x6c] sm:$0xf] %v1731
        %1796 = vst [vmem:[%s443 + $0x70] sm:$0xf] %v1732
        %1797 = vst [vmem:[%s443 + $0x74] sm:$0xf] %v1733
        %1798 = vst [vmem:[%s443 + $0x78] sm:$0xf] %v1734
        %1799 = vst [vmem:[%s443 + $0x7c] sm:$0xf] %v1735
        %s1800 = sand.u32 %s170, 1
        %s1801 = scalar_lea.sflag [#allocation4], %s1800
        %s1802 = sand.u32 %s170, 1
        %s1803 = smul.addr %s1802, 128
        %s1804 = scalar_lea.vmem [#allocation10], %s1803
        %s1805 = sand.u32 %s33, 1
        %s1806 = scalar_lea.sflag [#allocation12], %s1805
        %s1807 = sand.u32 %s200, 1
        %s1808 = smul.addr %s1807, 128
        %s1809 = scalar_lea.vmem [#allocation11], %s1808
        %s1810 = sand.u32 %s33, 1
        %s1811 = scalar_lea.sflag [#allocation12], %s1810
        %s1812 = sand.u32 %s230, 1
        %s1813 = smul.addr %s1812, 128
        %s1814 = scalar_lea.vmem [#allocation13], %s1813
        // Predicated region
        $region53: #{tpu_custom_call.1} parent=35 // pred_check
          %p1815 = pneg %p180
        $region54: #{tpu_custom_call.1} parent=35 // pred_check_branch
          %1817 = sbr.rel (%p1815) target = $region56
        $region55: #{tpu_custom_call.1} parent=35 // pred_region
          %s1818 = smul.u32 16, %s38
          %s1819 = smul.u32 2, %s40
          %s1821 = ssub.s32 2048, 2048
          %1822 = vsyncadd %s1801, %s1821
          %s1823 = smul.addr %s1818, 4
          %s1824 = sadd.s32 %s1819, %s1823
          %s1825 = smul.addr %s39, 128
          %s1826 = sadd.s32 %s1824, %s1825
          %s1827 = smul.addr %s1826, 64
          %s1828 = scalar_lea.hbm %s4, %s1827
          %s1829 = sshll.u32 %s1804, 4
          %s1830 = int_to_ptr.vmem [resolvable:$true] %s1829
          %1835 = dma.vmem_to_hbm [thread:$0]  %s1830, 2048, %s1828, %s1801, 128, 256, 8
        $region56: #{tpu_custom_call.1} parent=35 // pred_fallthru
          _
        // Predicated region
        $region57: #{tpu_custom_call.1} parent=35 // pred_check
          %p1836 = pneg %p210
        $region58: #{tpu_custom_call.1} parent=35 // pred_check_branch
          %1838 = sbr.rel (%p1836) target = $region60
        $region59: #{tpu_custom_call.1} parent=35 // pred_region
          %s1839 = smul.u32 32, %s40
          %s1841 = ssub.s32 2048, 2048
          %1842 = vsyncadd %s1806, %s1841
          %s1843 = smul.addr %s1839, 2
          %s1844 = sadd.s32 %s38, %s1843
          %s1845 = smul.addr %s39, 128
          %s1846 = sadd.s32 %s1844, %s1845
          %s1847 = smul.addr %s1846, 64
          %s1848 = scalar_lea.hbm %s5, %s1847
          %s1849 = sshll.u32 %s1809, 4
          %s1850 = int_to_ptr.vmem [resolvable:$true] %s1849
          %1855 = dma.vmem_to_hbm [thread:$0]  %s1850, 2048, %s1848, %s1806, 64, 128, 4
        $region60: #{tpu_custom_call.1} parent=35 // pred_fallthru
          _
        // Predicated region
        $region61: #{tpu_custom_call.1} parent=35 // pred_check
          %p1856 = pneg %p240
        $region62: #{tpu_custom_call.1} parent=35 // pred_check_branch
          %1858 = sbr.rel (%p1856) target = $region64
        $region63: #{tpu_custom_call.1} parent=35 // pred_region
          %s1859 = smul.u32 32, %s40
          %s1861 = ssub.s32 2048, 2048
          %1862 = vsyncadd %s1811, %s1861
          %s1863 = smul.addr %s1859, 2
          %s1864 = sadd.s32 %s38, %s1863
          %s1865 = smul.addr %s39, 128
          %s1866 = sadd.s32 %s1864, %s1865
          %s1867 = smul.addr %s1866, 64
          %s1868 = scalar_lea.hbm %s6, %s1867
          %s1869 = sshll.u32 %s1814, 4
          %s1870 = int_to_ptr.vmem [resolvable:$true] %s1869
          %1875 = dma.vmem_to_hbm [thread:$0]  %s1870, 2048, %s1868, %s1811, 64, 128, 4
        $region64: #{tpu_custom_call.1} parent=35 // pred_fallthru
          _
      $region36: #{tpu_custom_call.1} parent=5 // pred_fallthru
        _
      %p1876 = scmp.le.s32.totalorder 2, %s28
      // Predicated region
      $region65: #{tpu_custom_call.1} parent=5 // pred_check
        %p1877 = pneg %p1876
      $region66: #{tpu_custom_call.1} parent=5 // pred_check_branch
        %1879 = sbr.rel (%p1877) target = $region68
      $region67: #{tpu_custom_call.1} parent=5 // pred_region
        %s1880 = ssub.s32 %s28, 2
        // Predicated region
        $region69: #{tpu_custom_call.1} parent=67 // pred_check
          %p1881 = pneg %p186
        $region70: #{tpu_custom_call.1} parent=67 // pred_check_branch
          %1883 = sbr.rel (%p1881) target = $region72
        $region71: #{tpu_custom_call.1} parent=67 // pred_region
          %s1884 = sand.u32 %s171, 1
          %s1885 = scalar_lea.sflag [#allocation4], %s1884
          %s1886 = sand.u32 %s171, 1
          %s1887 = smul.addr %s1886, 128
          %s1888 = scalar_lea.vmem [#allocation10], %s1887
          %1889 = dma.done %s1885, 2048
        $region72: #{tpu_custom_call.1} parent=67 // pred_fallthru
          _
        // Predicated region
        $region73: #{tpu_custom_call.1} parent=67 // pred_check
          %p1890 = pneg %p216
        $region74: #{tpu_custom_call.1} parent=67 // pred_check_branch
          %1892 = sbr.rel (%p1890) target = $region76
        $region75: #{tpu_custom_call.1} parent=67 // pred_region
          %s1893 = sand.u32 %s34, 1
          %s1894 = scalar_lea.sflag [#allocation12], %s1893
          %s1895 = sand.u32 %s201, 1
          %s1896 = smul.addr %s1895, 128
          %s1897 = scalar_lea.vmem [#allocation11], %s1896
          %1898 = dma.done %s1894, 2048
        $region76: #{tpu_custom_call.1} parent=67 // pred_fallthru
          _
        // Predicated region
        $region77: #{tpu_custom_call.1} parent=67 // pred_check
          %p1899 = pneg %p246
        $region78: #{tpu_custom_call.1} parent=67 // pred_check_branch
          %1901 = sbr.rel (%p1899) target = $region80
        $region79: #{tpu_custom_call.1} parent=67 // pred_region
          %s1902 = sand.u32 %s34, 1
          %s1903 = scalar_lea.sflag [#allocation12], %s1902
          %s1904 = sand.u32 %s231, 1
          %s1905 = smul.addr %s1904, 128
          %s1906 = scalar_lea.vmem [#allocation13], %s1905
          %1907 = dma.done %s1903, 2048
        $region80: #{tpu_custom_call.1} parent=67 // pred_fallthru
          _
      $region68: #{tpu_custom_call.1} parent=5 // pred_fallthru
        _
    $region6: #{tpu_custom_call.1} parent=1 // loop_footer
      %s32 = sadd.s32 1, %s28
    $region7: #{tpu_custom_call.1} parent=1 // loop_footer_branch
      %27 = sbr.rel target = $region3
    $region8: #{tpu_custom_call.1} parent=1 // loop_exit
      _
    %1908 = vsyncpa [#allocation3], 1
    %s1909 = scalar_lea.sflag [#allocation3], 1
    %1910 = vsyncpa %s1909, 1
    %1911 = vsyncpa [#allocation6], 1
    %s1912 = scalar_lea.sflag [#allocation6], 1
    %1913 = vsyncpa %s1912, 1
    %1914 = vsyncpa [#allocation9], 1
    %s1915 = scalar_lea.sflag [#allocation9], 1
    %1916 = vsyncpa %s1915, 1
    %1917 = vsyncpa [#allocation4], 1
    %s1918 = scalar_lea.sflag [#allocation4], 1
    %1919 = vsyncpa %s1918, 1
    %1920 = vsyncpa [#allocation12], 1
    %s1921 = scalar_lea.sflag [#allocation12], 1
    %1922 = vsyncpa %s1921, 1

</llo_original>
